<compile_context>
chip_gen: v7x
topology: tpu7x:2x2x1
jax: 0.10.0
libtpu: 0.0.40
codegen_flags: <defaults>
</compile_context>

<pallas_src>
import jax
import jax.numpy as jnp
from jax.experimental import pallas as pl
from jax.experimental.pallas import tpu as pltpu


def _lap_binarize(x, row, col):
    """clamp(conv2d(x, laplacian3x3, padding=1), min=0) > 0.1  ->  {0,1}.

    Uses lap(x) = 9*x - box3x3(x) with a separable, roll-based box filter
    (zero boundary handling via the shared iota masks).  x: (H, W) float32.
    """
    H, W = x.shape
    zero = jnp.float32(0.0)

    # 3-tap sum along sublanes (axis 0) with zero padding.
    up = jnp.where(row == 0, zero, pltpu.roll(x, shift=1, axis=0))          # x[i-1, j]
    dn = jnp.where(row == H - 1, zero, pltpu.roll(x, shift=H - 1, axis=0))  # x[i+1, j]
    s = x + up + dn
    # 3-tap sum along lanes (axis 1) with zero padding.
    lf = jnp.where(col == 0, zero, pltpu.roll(s, shift=1, axis=1))          # s[i, j-1]
    rt = jnp.where(col == W - 1, zero, pltpu.roll(s, shift=W - 1, axis=1))  # s[i, j+1]
    box = s + lf + rt

    lap = jnp.maximum(9.0 * x - box, 0.0)
    return jnp.where(lap > 0.1, jnp.float32(1.0), jnp.float32(0.0))


def _boundary_kernel(seg_ref, gt_ref, out_ref, bv_ref, bi_ref):
    # seg_ref: (ct, H, W) logits slab; gt_ref: (H, W) mask; out_ref: (3, W).
    # bv_ref / bi_ref: running argmax value / index carried across channel tiles.
    cb = pl.program_id(1)
    ct = seg_ref.shape[0]
    H, W = gt_ref.shape

    @pl.when(cb == 0)
    def _init():
        bv_ref[...] = jnp.full(bv_ref.shape, -jnp.inf, bv_ref.dtype)
        bi_ref[...] = jnp.zeros(bi_ref.shape, bi_ref.dtype)

    # First-max-wins argmax (matches np.argmax): strict '>' keeps lowest index.
    base = cb * ct
    for c in range(ct):
        v = seg_ref[c]                        # load one (H, W) plane at a time
        upd = v > bv_ref[...]
        bv_ref[...] = jnp.where(upd, v, bv_ref[...])
        bi_ref[...] = jnp.where(upd, (base + c).astype(jnp.float32), bi_ref[...])

    @pl.when(cb == pl.num_programs(1) - 1)
    def _finalize():
        # Shared boundary masks for both Laplacian passes.
        row = jax.lax.broadcasted_iota(jnp.int32, (H, W), 0)
        col = jax.lax.broadcasted_iota(jnp.int32, (H, W), 1)
        # TODO(synk): torch casts argmax to uint8; indices wrap mod 256 only
        # when C > 256 (not modeled here).
        y = _lap_binarize(gt_ref[...].astype(jnp.float32), row, col)  # boundary_targets
        x = _lap_binarize(bi_ref[...], row, col)                      # boundary_logits
        # Lane-vector partial sums (reduced over sublanes); final scalar
        # reduction + closed-form BCE/sigmoid happen in the wrapper.
        out_ref[0:1, :] = jnp.sum(x, axis=0, keepdims=True)           # Sx per lane
        out_ref[1:2, :] = jnp.sum(y, axis=0, keepdims=True)           # Sy per lane
        out_ref[2:3, :] = jnp.sum(x * y, axis=0, keepdims=True)       # Sxy per lane


def boundary_loss(prodict_seg, gtmasks):
    """Returns (bce_loss, dice_loss), matching BoundaryLoss.forward semantics."""
    N, C, H, W = prodict_seg.shape
    # TODO(synk): F.interpolate(bilinear, align_corners=True) resize branch is
    # not implemented; prodict_seg and gtmasks are assumed to share spatial dims.
    assert gtmasks.shape == (N, H, W)

    # Channel tile size: keep each double-buffered logits slab around ~2 MiB.
    itemsize = jnp.dtype(prodict_seg.dtype).itemsize
    target_block_bytes = 2 * 1024 * 1024
    ct = max(1, min(C, target_block_bytes // max(1, H * W * itemsize)))
    while C % ct:   # make ct a divisor of C
        ct -= 1
    nc = C // ct
    # TODO(synk): for very large H*W (block > a few MiB) also tile H with a
    # 1-row halo so slabs stay inside the v7x 64 MiB VMEM budget.

    out = pl.pallas_call(
        _boundary_kernel,
        out_shape=jax.ShapeDtypeStruct((N, 3, W), jnp.float32),
        grid=(N, nc),
        in_specs=[
            pl.BlockSpec((None, ct, H, W), lambda n, cb: (n, cb, 0, 0)),
            pl.BlockSpec((None, H, W), lambda n, cb: (n, 0, 0)),
        ],
        out_specs=pl.BlockSpec((None, 3, W), lambda n, cb: (n, 0, 0)),
        scratch_shapes=[
            pltpu.VMEM((H, W), prodict_seg.dtype),   # best value (argmax carry)
            pltpu.VMEM((H, W), jnp.float32),         # best index (argmax carry)
        ],
        compiler_params=pltpu.CompilerParams(
            dimension_semantics=("parallel", "arbitrary"),
            vmem_limit_bytes=48 * 1024 * 1024,
        ),
    )(prodict_seg, gtmasks)

    # Finish the tiny reductions in plain JAX (glue).
    sums = jnp.sum(out, axis=-1)                     # (N, 3): Sx, Sy, Sxy
    sx, sy, sxy = sums[:, 0], sums[:, 1], sums[:, 2]
    hw = float(H * W)

    # Closed forms for x in {0,1}:
    #   bce(x,y) = ln2                      if x == 0
    #            = 1 + log1p(e^-1) - y      if x == 1
    #   sigmoid(x) = 0.5 (x=0), sigma(1) (x=1)
    ln2 = jnp.log(jnp.float32(2.0))
    c1 = 1.0 + jnp.log1p(jnp.exp(jnp.float32(-1.0)))
    sig1 = jax.nn.sigmoid(jnp.float32(1.0))

    bce_sum = (hw - sx) * ln2 + sx * c1 - sxy
    bce_loss = jnp.sum(bce_sum) / (N * hw)           # reduction='mean' over (N,1,H,W)

    isum = 0.5 * hw + (sig1 - 0.5) * sx              # sum sigmoid(x)
    inter = 0.5 * sy + (sig1 - 0.5) * sxy            # sum sigmoid(x)*y
    tsum = sy                                        # sum y
    smooth = 1.0
    dice_loss = jnp.mean(1.0 - (2.0 * inter + smooth) / (isum + tsum + smooth))
    return bce_loss, dice_loss


def _reference(prodict_seg, gtmasks):
    """Pure-JAX reference reproducing the torch forward (direct formulas)."""
    N, C, H, W = prodict_seg.shape
    lapk = jnp.array([[-1., -1., -1.], [-1., 8., -1.], [-1., -1., -1.]], jnp.float32)

    def conv(x):  # x: (N, H, W)
        xp = jnp.pad(x, ((0, 0), (1, 1), (1, 1)))
        o = jnp.zeros_like(x)
        for di in range(3):
            for dj in range(3):
                o = o + lapk[di, dj] * xp[:, di:di + H, dj:dj + W]
        return o

    def binarize(x):
        x = jnp.maximum(conv(x), 0.0)
        return jnp.where(x > 0.1, 1.0, 0.0)

    bt = binarize(gtmasks.astype(jnp.float32))
    am = jnp.argmax(jnp.transpose(prodict_seg, (0, 2, 3, 1)), axis=3).astype(jnp.float32)
    bl = binarize(am)

    bce = jnp.mean(jnp.maximum(bl, 0.0) - bl * bt + jnp.log(1.0 + jnp.exp(-jnp.abs(bl))))
    sig = jax.nn.sigmoid(bl)
    inter = jnp.sum(sig * bt, axis=(1, 2))
    isum = jnp.sum(sig, axis=(1, 2))
    tsum = jnp.sum(bt, axis=(1, 2))
    dice = jnp.mean(1.0 - (2.0 * inter + 1.0) / (isum + tsum + 1.0))
    return bce, dice


if __name__ == "__main__":
    key = jax.random.PRNGKey(0)
    k1, k2 = jax.random.split(key)
    N, C, H, W = 2, 4, 128, 128
    prodict_seg = jax.random.normal(k1, (N, C, H, W), jnp.float32)
    gtmasks = (jax.random.uniform(k2, (N, H, W)) > 0.5).astype(jnp.float32)

    bce, dice = boundary_loss(prodict_seg, gtmasks)
    jax.block_until_ready((bce, dice))

    bce_ref, dice_ref = _reference(prodict_seg, gtmasks)
    assert jnp.allclose(bce, bce_ref, atol=1e-5), (bce, bce_ref)
    assert jnp.allclose(dice, dice_ref, atol=1e-5), (dice, dice_ref)
    print("KERNEL_OK")
</pallas_src>

<mosaic_0001>
module attributes {stable_mosaic.version = 11 : i64} {
  func.func @_boundary_kernel(%arg0: i32, %arg1: i32, %arg2: memref<1x4x128x128xf32, #tpu.memory_space<vmem>>, %arg3: memref<1x128x128xf32, #tpu.memory_space<vmem>>, %arg4: memref<1x3x128xf32, #tpu.memory_space<vmem>>, %arg5: memref<128x128xf32, #tpu.memory_space<vmem>>, %arg6: memref<128x128xf32, #tpu.memory_space<vmem>>) attributes {dimension_semantics = [#tpu.dimension_semantics<parallel>, #tpu.dimension_semantics<arbitrary>], iteration_bounds = array<i64: 2, 1>, scalar_prefetch = 0 : i64, scratch_operands = 2 : i64, tpu.core_type = #tpu.core_type<tc>, window_params = [{transform_indices = @transform_0, window_bounds = array<i64: 1, 4, 128, 128>}, {transform_indices = @transform_1, window_bounds = array<i64: 1, 128, 128>}, {transform_indices = @transform_2, window_bounds = array<i64: 1, 3, 128>}]} {
    %c0_i32 = arith.constant 0 : i32
    %0 = arith.cmpi eq, %arg1, %c0_i32 : i32
    %1 = arith.extui %0 : i1 to i32
    %c0_i32_0 = arith.constant 0 : i32
    %2 = arith.cmpi ne, %1, %c0_i32_0 : i32
    scf.if %2 {
      %cst = arith.constant 0xFF800000 : f32
      %59 = vector.broadcast %cst : f32 to vector<128x128xf32>
      %c0_56 = arith.constant 0 : index
      %c0_57 = arith.constant 0 : index
      %60 = vector.load %arg5[%c0_56, %c0_57] : memref<128x128xf32, #tpu.memory_space<vmem>>, vector<128x128xf32>
      tpu.vector_store %arg5[%c0_56, %c0_57], %59 {strides = array<i32>} : memref<128x128xf32, #tpu.memory_space<vmem>>, vector<128x128xf32>,
      %cst_58 = arith.constant 0.000000e+00 : f32
      %61 = vector.broadcast %cst_58 : f32 to vector<128x128xf32>
      %c0_59 = arith.constant 0 : index
      %c0_60 = arith.constant 0 : index
      %62 = vector.load %arg6[%c0_59, %c0_60] : memref<128x128xf32, #tpu.memory_space<vmem>>, vector<128x128xf32>
      tpu.vector_store %arg6[%c0_59, %c0_60], %61 {strides = array<i32>} : memref<128x128xf32, #tpu.memory_space<vmem>>, vector<128x128xf32>,
    } else {
    }
    %c4_i32 = arith.constant 4 : i32
    %3 = arith.muli %arg1, %c4_i32 : i32
    %c0 = arith.constant 0 : index
    %c0_1 = arith.constant 0 : index
    %c0_2 = arith.constant 0 : index
    %c0_3 = arith.constant 0 : index
    %4 = vector.load %arg2[%c0, %c0_1, %c0_2, %c0_3] : memref<1x4x128x128xf32, #tpu.memory_space<vmem>>, vector<1x1x128x128xf32>
    %5 = vector.shape_cast %4 : vector<1x1x128x128xf32> to vector<128x128xf32>
    %c0_4 = arith.constant 0 : index
    %c0_5 = arith.constant 0 : index
    %6 = vector.load %arg5[%c0_4, %c0_5] : memref<128x128xf32, #tpu.memory_space<vmem>>, vector<128x128xf32>
    %7 = arith.cmpf ogt, %5, %6 : vector<128x128xf32>
    %c0_6 = arith.constant 0 : index
    %c0_7 = arith.constant 0 : index
    %8 = vector.load %arg5[%c0_6, %c0_7] : memref<128x128xf32, #tpu.memory_space<vmem>>, vector<128x128xf32>
    %9 = arith.select %7, %5, %8 : vector<128x128xi1>, vector<128x128xf32>
    %c0_8 = arith.constant 0 : index
    %c0_9 = arith.constant 0 : index
    %10 = vector.load %arg5[%c0_8, %c0_9] : memref<128x128xf32, #tpu.memory_space<vmem>>, vector<128x128xf32>
    tpu.vector_store %arg5[%c0_8, %c0_9], %9 {strides = array<i32>} : memref<128x128xf32, #tpu.memory_space<vmem>>, vector<128x128xf32>,
    %c0_i32_10 = arith.constant 0 : i32
    %11 = arith.addi %3, %c0_i32_10 : i32
    %12 = arith.sitofp %11 : i32 to f32
    %c0_11 = arith.constant 0 : index
    %c0_12 = arith.constant 0 : index
    %13 = vector.load %arg6[%c0_11, %c0_12] : memref<128x128xf32, #tpu.memory_space<vmem>>, vector<128x128xf32>
    %14 = vector.broadcast %12 : f32 to vector<128x128xf32>
    %15 = arith.select %7, %14, %13 : vector<128x128xi1>, vector<128x128xf32>
    %c0_13 = arith.constant 0 : index
    %c0_14 = arith.constant 0 : index
    %16 = vector.load %arg6[%c0_13, %c0_14] : memref<128x128xf32, #tpu.memory_space<vmem>>, vector<128x128xf32>
    tpu.vector_store %arg6[%c0_13, %c0_14], %15 {strides = array<i32>} : memref<128x128xf32, #tpu.memory_space<vmem>>, vector<128x128xf32>,
    %c0_15 = arith.constant 0 : index
    %c1 = arith.constant 1 : index
    %c0_16 = arith.constant 0 : index
    %c0_17 = arith.constant 0 : index
    %17 = vector.load %arg2[%c0_15, %c1, %c0_16, %c0_17] : memref<1x4x128x128xf32, #tpu.memory_space<vmem>>, vector<1x1x128x128xf32>
    %18 = vector.shape_cast %17 : vector<1x1x128x128xf32> to vector<128x128xf32>
    %c0_18 = arith.constant 0 : index
    %c0_19 = arith.constant 0 : index
    %19 = vector.load %arg5[%c0_18, %c0_19] : memref<128x128xf32, #tpu.memory_space<vmem>>, vector<128x128xf32>
    %20 = arith.cmpf ogt, %18, %19 : vector<128x128xf32>
    %c0_20 = arith.constant 0 : index
    %c0_21 = arith.constant 0 : index
    %21 = vector.load %arg5[%c0_20, %c0_21] : memref<128x128xf32, #tpu.memory_space<vmem>>, vector<128x128xf32>
    %22 = arith.select %20, %18, %21 : vector<128x128xi1>, vector<128x128xf32>
    %c0_22 = arith.constant 0 : index
    %c0_23 = arith.constant 0 : index
    %23 = vector.load %arg5[%c0_22, %c0_23] : memref<128x128xf32, #tpu.memory_space<vmem>>, vector<128x128xf32>
    tpu.vector_store %arg5[%c0_22, %c0_23], %22 {strides = array<i32>} : memref<128x128xf32, #tpu.memory_space<vmem>>, vector<128x128xf32>,
    %c1_i32 = arith.constant 1 : i32
    %24 = arith.addi %3, %c1_i32 : i32
    %25 = arith.sitofp %24 : i32 to f32
    %c0_24 = arith.constant 0 : index
    %c0_25 = arith.constant 0 : index
    %26 = vector.load %arg6[%c0_24, %c0_25] : memref<128x128xf32, #tpu.memory_space<vmem>>, vector<128x128xf32>
    %27 = vector.broadcast %25 : f32 to vector<128x128xf32>
    %28 = arith.select %20, %27, %26 : vector<128x128xi1>, vector<128x128xf32>
    %c0_26 = arith.constant 0 : index
    %c0_27 = arith.constant 0 : index
    %29 = vector.load %arg6[%c0_26, %c0_27] : memref<128x128xf32, #tpu.memory_space<vmem>>, vector<128x128xf32>
    tpu.vector_store %arg6[%c0_26, %c0_27], %28 {strides = array<i32>} : memref<128x128xf32, #tpu.memory_space<vmem>>, vector<128x128xf32>,
    %c0_28 = arith.constant 0 : index
    %c2 = arith.constant 2 : index
    %c0_29 = arith.constant 0 : index
    %c0_30 = arith.constant 0 : index
    %30 = vector.load %arg2[%c0_28, %c2, %c0_29, %c0_30] : memref<1x4x128x128xf32, #tpu.memory_space<vmem>>, vector<1x1x128x128xf32>
    %31 = vector.shape_cast %30 : vector<1x1x128x128xf32> to vector<128x128xf32>
    %c0_31 = arith.constant 0 : index
    %c0_32 = arith.constant 0 : index
    %32 = vector.load %arg5[%c0_31, %c0_32] : memref<128x128xf32, #tpu.memory_space<vmem>>, vector<128x128xf32>
    %33 = arith.cmpf ogt, %31, %32 : vector<128x128xf32>
    %c0_33 = arith.constant 0 : index
    %c0_34 = arith.constant 0 : index
    %34 = vector.load %arg5[%c0_33, %c0_34] : memref<128x128xf32, #tpu.memory_space<vmem>>, vector<128x128xf32>
    %35 = arith.select %33, %31, %34 : vector<128x128xi1>, vector<128x128xf32>
    %c0_35 = arith.constant 0 : index
    %c0_36 = arith.constant 0 : index
    %36 = vector.load %arg5[%c0_35, %c0_36] : memref<128x128xf32, #tpu.memory_space<vmem>>, vector<128x128xf32>
    tpu.vector_store %arg5[%c0_35, %c0_36], %35 {strides = array<i32>} : memref<128x128xf32, #tpu.memory_space<vmem>>, vector<128x128xf32>,
    %c2_i32 = arith.constant 2 : i32
    %37 = arith.addi %3, %c2_i32 : i32
    %38 = arith.sitofp %37 : i32 to f32
    %c0_37 = arith.constant 0 : index
    %c0_38 = arith.constant 0 : index
    %39 = vector.load %arg6[%c0_37, %c0_38] : memref<128x128xf32, #tpu.memory_space<vmem>>, vector<128x128xf32>
    %40 = vector.broadcast %38 : f32 to vector<128x128xf32>
    %41 = arith.select %33, %40, %39 : vector<128x128xi1>, vector<128x128xf32>
    %c0_39 = arith.constant 0 : index
    %c0_40 = arith.constant 0 : index
    %42 = vector.load %arg6[%c0_39, %c0_40] : memref<128x128xf32, #tpu.memory_space<vmem>>, vector<128x128xf32>
    tpu.vector_store %arg6[%c0_39, %c0_40], %41 {strides = array<i32>} : memref<128x128xf32, #tpu.memory_space<vmem>>, vector<128x128xf32>,
    %c0_41 = arith.constant 0 : index
    %c3 = arith.constant 3 : index
    %c0_42 = arith.constant 0 : index
    %c0_43 = arith.constant 0 : index
    %43 = vector.load %arg2[%c0_41, %c3, %c0_42, %c0_43] : memref<1x4x128x128xf32, #tpu.memory_space<vmem>>, vector<1x1x128x128xf32>
    %44 = vector.shape_cast %43 : vector<1x1x128x128xf32> to vector<128x128xf32>
    %c0_44 = arith.constant 0 : index
    %c0_45 = arith.constant 0 : index
    %45 = vector.load %arg5[%c0_44, %c0_45] : memref<128x128xf32, #tpu.memory_space<vmem>>, vector<128x128xf32>
    %46 = arith.cmpf ogt, %44, %45 : vector<128x128xf32>
    %c0_46 = arith.constant 0 : index
    %c0_47 = arith.constant 0 : index
    %47 = vector.load %arg5[%c0_46, %c0_47] : memref<128x128xf32, #tpu.memory_space<vmem>>, vector<128x128xf32>
    %48 = arith.select %46, %44, %47 : vector<128x128xi1>, vector<128x128xf32>
    %c0_48 = arith.constant 0 : index
    %c0_49 = arith.constant 0 : index
    %49 = vector.load %arg5[%c0_48, %c0_49] : memref<128x128xf32, #tpu.memory_space<vmem>>, vector<128x128xf32>
    tpu.vector_store %arg5[%c0_48, %c0_49], %48 {strides = array<i32>} : memref<128x128xf32, #tpu.memory_space<vmem>>, vector<128x128xf32>,
    %c3_i32 = arith.constant 3 : i32
    %50 = arith.addi %3, %c3_i32 : i32
    %51 = arith.sitofp %50 : i32 to f32
    %c0_50 = arith.constant 0 : index
    %c0_51 = arith.constant 0 : index
    %52 = vector.load %arg6[%c0_50, %c0_51] : memref<128x128xf32, #tpu.memory_space<vmem>>, vector<128x128xf32>
    %53 = vector.broadcast %51 : f32 to vector<128x128xf32>
    %54 = arith.select %46, %53, %52 : vector<128x128xi1>, vector<128x128xf32>
    %c0_52 = arith.constant 0 : index
    %c0_53 = arith.constant 0 : index
    %55 = vector.load %arg6[%c0_52, %c0_53] : memref<128x128xf32, #tpu.memory_space<vmem>>, vector<128x128xf32>
    tpu.vector_store %arg6[%c0_52, %c0_53], %54 {strides = array<i32>} : memref<128x128xf32, #tpu.memory_space<vmem>>, vector<128x128xf32>,
    %c0_i32_54 = arith.constant 0 : i32
    %56 = arith.cmpi eq, %arg1, %c0_i32_54 : i32
    %57 = arith.extui %56 : i1 to i32
    %c0_i32_55 = arith.constant 0 : i32
    %58 = arith.cmpi ne, %57, %c0_i32_55 : i32
    scf.if %58 {
      %59 = tpu.iota {dimensions = array<i32: 0>} : vector<128x128xi32>
      %60 = tpu.iota {dimensions = array<i32: 1>} : vector<128x128xi32>
      %c0_56 = arith.constant 0 : index
      %c0_57 = arith.constant 0 : index
      %c0_58 = arith.constant 0 : index
      %61 = vector.load %arg3[%c0_56, %c0_57, %c0_58] : memref<1x128x128xf32, #tpu.memory_space<vmem>>, vector<1x128x128xf32>
      %62 = vector.shape_cast %61 : vector<1x128x128xf32> to vector<128x128xf32>
      %c0_i32_59 = arith.constant 0 : i32
      %63 = vector.broadcast %c0_i32_59 : i32 to vector<128x128xi32>
      %64 = arith.cmpi eq, %59, %63 : vector<128x128xi32>
      %c1_i32_60 = arith.constant 1 : i32
      %65 = tpu.dynamic_rotate %62 by %c1_i32_60 dim 0 : vector<128x128xf32>, i32 -> vector<128x128xf32>
      %cst = arith.constant 0.000000e+00 : f32
      %66 = vector.broadcast %cst : f32 to vector<128x128xf32>
      %67 = arith.select %64, %66, %65 : vector<128x128xi1>, vector<128x128xf32>
      %c127_i32 = arith.constant 127 : i32
      %68 = vector.broadcast %c127_i32 : i32 to vector<128x128xi32>
      %69 = arith.cmpi eq, %59, %68 : vector<128x128xi32>
      %c127_i32_61 = arith.constant 127 : i32
      %70 = tpu.dynamic_rotate %62 by %c127_i32_61 dim 0 : vector<128x128xf32>, i32 -> vector<128x128xf32>
      %cst_62 = arith.constant 0.000000e+00 : f32
      %71 = vector.broadcast %cst_62 : f32 to vector<128x128xf32>
      %72 = arith.select %69, %71, %70 : vector<128x128xi1>, vector<128x128xf32>
      %73 = arith.addf %62, %67 : vector<128x128xf32>
      %74 = arith.addf %73, %72 : vector<128x128xf32>
      %c0_i32_63 = arith.constant 0 : i32
      %75 = vector.broadcast %c0_i32_63 : i32 to vector<128x128xi32>
      %76 = arith.cmpi eq, %60, %75 : vector<128x128xi32>
      %c1_i32_64 = arith.constant 1 : i32
      %77 = tpu.dynamic_rotate %74 by %c1_i32_64 dim 1 : vector<128x128xf32>, i32 -> vector<128x128xf32>
      %cst_65 = arith.constant 0.000000e+00 : f32
      %78 = vector.broadcast %cst_65 : f32 to vector<128x128xf32>
      %79 = arith.select %76, %78, %77 : vector<128x128xi1>, vector<128x128xf32>
      %c127_i32_66 = arith.constant 127 : i32
      %80 = vector.broadcast %c127_i32_66 : i32 to vector<128x128xi32>
      %81 = arith.cmpi eq, %60, %80 : vector<128x128xi32>
      %c127_i32_67 = arith.constant 127 : i32
      %82 = tpu.dynamic_rotate %74 by %c127_i32_67 dim 1 : vector<128x128xf32>, i32 -> vector<128x128xf32>
      %cst_68 = arith.constant 0.000000e+00 : f32
      %83 = vector.broadcast %cst_68 : f32 to vector<128x128xf32>
      %84 = arith.select %81, %83, %82 : vector<128x128xi1>, vector<128x128xf32>
      %85 = arith.addf %74, %79 : vector<128x128xf32>
      %86 = arith.addf %85, %84 : vector<128x128xf32>
      %cst_69 = arith.constant 9.000000e+00 : f32
      %87 = vector.broadcast %cst_69 : f32 to vector<128x128xf32>
      %88 = arith.mulf %87, %62 : vector<128x128xf32>
      %89 = arith.subf %88, %86 : vector<128x128xf32>
      %cst_70 = arith.constant 0.000000e+00 : f32
      %90 = vector.broadcast %cst_70 : f32 to vector<128x128xf32>
      %91 = arith.maximumf %89, %90 : vector<128x128xf32>
      %cst_71 = arith.constant 1.000000e-01 : f32
      %92 = vector.broadcast %cst_71 : f32 to vector<128x128xf32>
      %93 = arith.cmpf ogt, %91, %92 : vector<128x128xf32>
      %cst_72 = arith.constant 1.000000e+00 : f32
      %cst_73 = arith.constant 0.000000e+00 : f32
      %94 = vector.broadcast %cst_72 : f32 to vector<128x128xf32>
      %95 = vector.broadcast %cst_73 : f32 to vector<128x128xf32>
      %96 = arith.select %93, %94, %95 : vector<128x128xi1>, vector<128x128xf32>
      %c0_74 = arith.constant 0 : index
      %c0_75 = arith.constant 0 : index
      %97 = vector.load %arg6[%c0_74, %c0_75] : memref<128x128xf32, #tpu.memory_space<vmem>>, vector<128x128xf32>
      %c0_i32_76 = arith.constant 0 : i32
      %98 = vector.broadcast %c0_i32_76 : i32 to vector<128x128xi32>
      %99 = arith.cmpi eq, %59, %98 : vector<128x128xi32>
      %c1_i32_77 = arith.constant 1 : i32
      %100 = tpu.dynamic_rotate %97 by %c1_i32_77 dim 0 : vector<128x128xf32>, i32 -> vector<128x128xf32>
      %cst_78 = arith.constant 0.000000e+00 : f32
      %101 = vector.broadcast %cst_78 : f32 to vector<128x128xf32>
      %102 = arith.select %99, %101, %100 : vector<128x128xi1>, vector<128x128xf32>
      %c127_i32_79 = arith.constant 127 : i32
      %103 = vector.broadcast %c127_i32_79 : i32 to vector<128x128xi32>
      %104 = arith.cmpi eq, %59, %103 : vector<128x128xi32>
      %c127_i32_80 = arith.constant 127 : i32
      %105 = tpu.dynamic_rotate %97 by %c127_i32_80 dim 0 : vector<128x128xf32>, i32 -> vector<128x128xf32>
      %cst_81 = arith.constant 0.000000e+00 : f32
      %106 = vector.broadcast %cst_81 : f32 to vector<128x128xf32>
      %107 = arith.select %104, %106, %105 : vector<128x128xi1>, vector<128x128xf32>
      %108 = arith.addf %97, %102 : vector<128x128xf32>
      %109 = arith.addf %108, %107 : vector<128x128xf32>
      %c0_i32_82 = arith.constant 0 : i32
      %110 = vector.broadcast %c0_i32_82 : i32 to vector<128x128xi32>
      %111 = arith.cmpi eq, %60, %110 : vector<128x128xi32>
      %c1_i32_83 = arith.constant 1 : i32
      %112 = tpu.dynamic_rotate %109 by %c1_i32_83 dim 1 : vector<128x128xf32>, i32 -> vector<128x128xf32>
      %cst_84 = arith.constant 0.000000e+00 : f32
      %113 = vector.broadcast %cst_84 : f32 to vector<128x128xf32>
      %114 = arith.select %111, %113, %112 : vector<128x128xi1>, vector<128x128xf32>
      %c127_i32_85 = arith.constant 127 : i32
      %115 = vector.broadcast %c127_i32_85 : i32 to vector<128x128xi32>
      %116 = arith.cmpi eq, %60, %115 : vector<128x128xi32>
      %c127_i32_86 = arith.constant 127 : i32
      %117 = tpu.dynamic_rotate %109 by %c127_i32_86 dim 1 : vector<128x128xf32>, i32 -> vector<128x128xf32>
      %cst_87 = arith.constant 0.000000e+00 : f32
      %118 = vector.broadcast %cst_87 : f32 to vector<128x128xf32>
      %119 = arith.select %116, %118, %117 : vector<128x128xi1>, vector<128x128xf32>
      %120 = arith.addf %109, %114 : vector<128x128xf32>
      %121 = arith.addf %120, %119 : vector<128x128xf32>
      %cst_88 = arith.constant 9.000000e+00 : f32
      %122 = vector.broadcast %cst_88 : f32 to vector<128x128xf32>
      %123 = arith.mulf %122, %97 : vector<128x128xf32>
      %124 = arith.subf %123, %121 : vector<128x128xf32>
      %cst_89 = arith.constant 0.000000e+00 : f32
      %125 = vector.broadcast %cst_89 : f32 to vector<128x128xf32>
      %126 = arith.maximumf %124, %125 : vector<128x128xf32>
      %cst_90 = arith.constant 1.000000e-01 : f32
      %127 = vector.broadcast %cst_90 : f32 to vector<128x128xf32>
      %128 = arith.cmpf ogt, %126, %127 : vector<128x128xf32>
      %cst_91 = arith.constant 1.000000e+00 : f32
      %cst_92 = arith.constant 0.000000e+00 : f32
      %129 = vector.broadcast %cst_91 : f32 to vector<128x128xf32>
      %130 = vector.broadcast %cst_92 : f32 to vector<128x128xf32>
      %131 = arith.select %128, %129, %130 : vector<128x128xi1>, vector<128x128xf32>
      %cst_93 = arith.constant dense<0.000000e+00> : vector<128xf32>
      %132 = vector.multi_reduction <add>, %131, %cst_93 [0] : vector<128x128xf32> to vector<128xf32>
      %133 = vector.shape_cast %132 : vector<128xf32> to vector<1x128xf32>
      %c0_94 = arith.constant 0 : index
      %c0_95 = arith.constant 0 : index
      %c0_96 = arith.constant 0 : index
      %134 = vector.load %arg4[%c0_94, %c0_95, %c0_96] : memref<1x3x128xf32, #tpu.memory_space<vmem>>, vector<1x1x128xf32>
      %135 = vector.shape_cast %134 : vector<1x1x128xf32> to vector<1x128xf32>
      %136 = vector.shape_cast %133 : vector<1x128xf32> to vector<1x1x128xf32>
      tpu.vector_store %arg4[%c0_94, %c0_95, %c0_96], %136 {strides = array<i32>} : memref<1x3x128xf32, #tpu.memory_space<vmem>>, vector<1x1x128xf32>,
      %cst_97 = arith.constant dense<0.000000e+00> : vector<128xf32>
      %137 = vector.multi_reduction <add>, %96, %cst_97 [0] : vector<128x128xf32> to vector<128xf32>
      %138 = vector.shape_cast %137 : vector<128xf32> to vector<1x128xf32>
      %c0_98 = arith.constant 0 : index
      %c1_99 = arith.constant 1 : index
      %c0_100 = arith.constant 0 : index
      %139 = vector.load %arg4[%c0_98, %c1_99, %c0_100] : memref<1x3x128xf32, #tpu.memory_space<vmem>>, vector<1x1x128xf32>
      %140 = vector.shape_cast %139 : vector<1x1x128xf32> to vector<1x128xf32>
      %141 = vector.shape_cast %138 : vector<1x128xf32> to vector<1x1x128xf32>
      tpu.vector_store %arg4[%c0_98, %c1_99, %c0_100], %141 {strides = array<i32>} : memref<1x3x128xf32, #tpu.memory_space<vmem>>, vector<1x1x128xf32>,
      %142 = arith.mulf %131, %96 : vector<128x128xf32>
      %cst_101 = arith.constant dense<0.000000e+00> : vector<128xf32>
      %143 = vector.multi_reduction <add>, %142, %cst_101 [0] : vector<128x128xf32> to vector<128xf32>
      %144 = vector.shape_cast %143 : vector<128xf32> to vector<1x128xf32>
      %c0_102 = arith.constant 0 : index
      %c2_103 = arith.constant 2 : index
      %c0_104 = arith.constant 0 : index
      %145 = vector.load %arg4[%c0_102, %c2_103, %c0_104] : memref<1x3x128xf32, #tpu.memory_space<vmem>>, vector<1x1x128xf32>
      %146 = vector.shape_cast %145 : vector<1x1x128xf32> to vector<1x128xf32>
      %147 = vector.shape_cast %144 : vector<1x128xf32> to vector<1x1x128xf32>
      tpu.vector_store %arg4[%c0_102, %c2_103, %c0_104], %147 {strides = array<i32>} : memref<1x3x128xf32, #tpu.memory_space<vmem>>, vector<1x1x128xf32>,
    } else {
    }
    return
  }
  func.func @transform_0(%arg0: i32, %arg1: i32) -> (i32, i32, i32, i32) {
    %c0_i32 = arith.constant 0 : i32
    %c0_i32_0 = arith.constant 0 : i32
    %c0_i32_1 = arith.constant 0 : i32
    return %arg0, %arg1, %c0_i32, %c0_i32_0 : i32, i32, i32, i32
  }
  func.func @transform_1(%arg0: i32, %arg1: i32) -> (i32, i32, i32) {
    %c0_i32 = arith.constant 0 : i32
    %c0_i32_0 = arith.constant 0 : i32
    %c0_i32_1 = arith.constant 0 : i32
    return %arg0, %c0_i32, %c0_i32_0 : i32, i32, i32
  }
  func.func @transform_2(%arg0: i32, %arg1: i32) -> (i32, i32, i32) {
    %c0_i32 = arith.constant 0 : i32
    %c0_i32_0 = arith.constant 0 : i32
    %c0_i32_1 = arith.constant 0 : i32
    return %arg0, %c0_i32, %c0_i32_0 : i32, i32, i32
  }
}

</mosaic_0001>

<llo_original>
// kernel: tpu_custom_call.1
$region0: #{tpu_custom_call.1}
  #allocation0 [shape = 'u32[]', space=smem, size = 0x4, offset = 0x4, fixed_abs, tag = 'smem constant byte address 0x4 - core index']
  #allocation1 [shape = 'u32[144,128]{1,0:T(1,128)}', space=vmem, size = 0x12000, scoped, tag = 'internal scratch']
  #allocation2 [shape = 'f32[128,128]{1,0:T(8,128)}', space=vmem, size = 0x10000, scoped, tag = 'scratch operand']
  #allocation3 [shape = 'f32[128,128]{1,0:T(8,128)}', space=vmem, size = 0x10000, scoped, tag = 'scratch operand']
  %s0 = inlined_call_operand.hbm [shape: f32[2,4,128,128], index: 0, kind: input, shape index: {}]
  %s1 = inlined_call_operand.hbm [shape: f32[2,128,128], index: 1, kind: input, shape index: {}]
  %s2 = inlined_call_operand.vmem [shape: f32[2,3,128], index: 2, kind: output, shape index: {}]
  %s3 = sld [smem:[#allocation0]]
  $region57: #{tpu_custom_call.1} parent=0
    _
  %s5 = ssub.s32 1, %s3
  %s6 = scalar_select 0, %s5, %s3
  $region1: #{tpu_custom_call.1} parent=0
    #allocation4 [shape = 'u8[524288]{0}', space=vmem, size = 0x80000, scoped, tag = 'input window, operand 0']
    #allocation5 [shape = 's32[2]{0}', space=sflag, size = 0x8, scoped, tag = 'scoped memory for tpu_custom_call.1']
    #allocation6 [shape = 'u8[131072]{0}', space=vmem, size = 0x20000, scoped, tag = 'input window, operand 1']
    #allocation7 [shape = 's32[2]{0}', space=sflag, size = 0x8, scoped, tag = 'scoped memory for tpu_custom_call.1']
    %7 = vsyncpa [#allocation5], 0
    %s8 = scalar_lea.sflag [#allocation5], 1
    %9 = vsyncpa %s8, 0
    %10 = vsyncpa [#allocation7], 0
    %s11 = scalar_lea.sflag [#allocation7], 1
    %12 = vsyncpa %s11, 0
    loop: start=0, step=1, limit=4
    $region2: #{tpu_custom_call.1} parent=1 // loop_pre_header
      _
    $region3: #{tpu_custom_call.1} parent=1 // loop_header
      %s14 = sphi 0, %s18
      %p15 = scmp.ge.s32.totalorder %s14, 4
      %s21 = sphi 0, %s33
      %s22 = sphi 0, %s29
      %s23 = sphi 0, %s21
      %s24 = sphi 0, %s22
      %s25 = sphi 0, %s23
      %s26 = sphi 0, %s24
      %s38 = sphi 0, %s40
      %s41 = sphi 0, %s38
      %s42 = sphi 0, %s41
      %s58 = sphi 0, %s42
      %s64 = sphi 0, %s66
      %s67 = sphi 0, %s64
      %s68 = sphi 0, %s67
      %s84 = sphi 0, %s68
      %s90 = sphi 0, %s92
      %s93 = sphi 0, %s90
      %s94 = sphi 0, %s93
      %s110 = sphi 0, %s94
    $region4: #{tpu_custom_call.1} parent=1 // loop_header_branch
      %17 = sbr.rel (%p15) target = $region8
    $region5: #{tpu_custom_call.1} parent=1 // loop_body
      %s19 = ssub.s32 %s14, 1
      %s20 = ssub.s32 %s14, 2
      %s27 = sadd.s32 1, %s22
      %p28 = scmp.ge.s32.totalorder %s27, 1
      %s29 = scalar_select %p28, 0, %s27
      %s30 = sadd.s32 1, %s21
      %s31 = scalar_select %p28, %s30, %s21
      %p32 = scmp.ge.s32.totalorder %s31, 2
      %s33 = scalar_select %p32, 0, %s31
      %s34 = ssub.s32 %s21, %s33
      %s35 = ssub.s32 %s22, %s29
      %s36 = sor.u32 %s34, %s35
      %p37 = scmp.eq.s32.totalorder %s36, 0
      %s39 = sadd.s32 %s38, 1
      %s40 = scalar_select %p37, %s38, %s39
      %p43 = pneg %p37
      %p44 = scmp.eq.s32.totalorder %s14, 1
      %p45 = por %p43, %p44
      %p46 = scmp.ne.s32.totalorder %s38, %s41
      %p47 = scmp.eq.s32.totalorder %s14, 0
      %p48 = por %p46, %p47
      %p49 = scmp.ne.s32.totalorder %s38, %s41
      %p50 = scmp.eq.s32.totalorder %s19, 1
      %p51 = por %p49, %p50
      %p52 = scmp.ne.s32.totalorder %s41, %s42
      %p53 = scmp.eq.s32.totalorder %s19, 0
      %p54 = por %p52, %p53
      %p55 = scmp.ne.s32.totalorder %s41, %s42
      %p56 = scmp.eq.s32.totalorder %s20, 1
      %p57 = por %p55, %p56
      %p59 = scmp.ne.s32.totalorder %s42, %s58
      %p60 = scmp.eq.s32.totalorder %s20, 0
      %p61 = por %p59, %p60
      %s62 = ssub.s32 %s21, %s33
      %p63 = scmp.eq.s32.totalorder %s62, 0
      %s65 = sadd.s32 %s64, 1
      %s66 = scalar_select %p63, %s64, %s65
      %p69 = pneg %p63
      %p70 = scmp.eq.s32.totalorder %s14, 1
      %p71 = por %p69, %p70
      %p72 = scmp.ne.s32.totalorder %s64, %s67
      %p73 = scmp.eq.s32.totalorder %s14, 0
      %p74 = por %p72, %p73
      %p75 = scmp.ne.s32.totalorder %s64, %s67
      %p76 = scmp.eq.s32.totalorder %s19, 1
      %p77 = por %p75, %p76
      %p78 = scmp.ne.s32.totalorder %s67, %s68
      %p79 = scmp.eq.s32.totalorder %s19, 0
      %p80 = por %p78, %p79
      %p81 = scmp.ne.s32.totalorder %s67, %s68
      %p82 = scmp.eq.s32.totalorder %s20, 1
      %p83 = por %p81, %p82
      %p85 = scmp.ne.s32.totalorder %s68, %s84
      %p86 = scmp.eq.s32.totalorder %s20, 0
      %p87 = por %p85, %p86
      %s88 = ssub.s32 %s21, %s33
      %p89 = scmp.eq.s32.totalorder %s88, 0
      %s91 = sadd.s32 %s90, 1
      %s92 = scalar_select %p89, %s90, %s91
      %p95 = pneg %p89
      %p96 = scmp.eq.s32.totalorder %s14, 1
      %p97 = por %p95, %p96
      %p98 = scmp.ne.s32.totalorder %s90, %s93
      %p99 = scmp.eq.s32.totalorder %s14, 0
      %p100 = por %p98, %p99
      %p101 = scmp.ne.s32.totalorder %s90, %s93
      %p102 = scmp.eq.s32.totalorder %s19, 1
      %p103 = por %p101, %p102
      %p104 = scmp.ne.s32.totalorder %s93, %s94
      %p105 = scmp.eq.s32.totalorder %s19, 0
      %p106 = por %p104, %p105
      %p107 = scmp.ne.s32.totalorder %s93, %s94
      %p108 = scmp.eq.s32.totalorder %s20, 1
      %p109 = por %p107, %p108
      %p111 = scmp.ne.s32.totalorder %s94, %s110
      %p112 = scmp.eq.s32.totalorder %s20, 0
      %p113 = por %p111, %p112
      %p114 = scmp.le.s32.totalorder 1, %s14
      %p115 = scmp.lt.s32.totalorder %s14, 3
      %p116 = pnand %p114, %p115
      %p117 = pneg %p116
      // Predicated region
      $region9: #{tpu_custom_call.1} parent=5 // pred_check
        _
      $region10: #{tpu_custom_call.1} parent=5 // pred_check_branch
        %119 = sbr.rel (%p116) target = $region12
      $region11: #{tpu_custom_call.1} parent=5 // pred_region
        %s120 = ssub.s32 %s14, 1
      $region12: #{tpu_custom_call.1} parent=5 // pred_fallthru
        _
      %p121 = scmp.lt.s32.totalorder %s14, 2
      // Predicated region
      $region13: #{tpu_custom_call.1} parent=5 // pred_check
        %p122 = pneg %p121
      $region14: #{tpu_custom_call.1} parent=5 // pred_check_branch
        %124 = sbr.rel (%p122) target = $region16
      $region15: #{tpu_custom_call.1} parent=5 // pred_region
        // Predicated region
        $region17: #{tpu_custom_call.1} parent=15 // pred_check
          %p125 = pneg %p48
        $region18: #{tpu_custom_call.1} parent=15 // pred_check_branch
          %127 = sbr.rel (%p125) target = $region20
        $region19: #{tpu_custom_call.1} parent=15 // pred_region
          %s128 = sand.u32 %s38, 1
          %s129 = scalar_lea.sflag [#allocation5], %s128
          %s130 = sand.u32 %s38, 1
          %s131 = smul.addr %s130, 512
          %s132 = scalar_lea.vmem [#allocation4], %s131
          %s133 = smul.u32 4, %s22
          %s135 = ssub.s32 8192, 8192
          %136 = vsyncadd %s129, %s135
          %s137 = smul.addr %s133, 16
          %s138 = smul.addr %s21, 64
          %s139 = sadd.s32 %s137, %s138
          %s140 = smul.addr %s139, 128
          %s141 = scalar_lea.hbm %s0, %s140
          %s142 = sshll.u32 %s132, 4
          %s143 = int_to_ptr.vmem [resolvable:$true] %s142
          %148 = dma.hbm_to_vmem [thread:$0]  %s141, 8192, %s143, %s129, 128, 128, 8
        $region20: #{tpu_custom_call.1} parent=15 // pred_fallthru
          _
        // Predicated region
        $region21: #{tpu_custom_call.1} parent=15 // pred_check
          %p149 = pneg %p74
        $region22: #{tpu_custom_call.1} parent=15 // pred_check_branch
          %151 = sbr.rel (%p149) target = $region24
        $region23: #{tpu_custom_call.1} parent=15 // pred_region
          %s152 = sand.u32 %s64, 1
          %s153 = scalar_lea.sflag [#allocation7], %s152
          %s154 = sand.u32 %s64, 1
          %s155 = smul.addr %s154, 128
          %s156 = scalar_lea.vmem [#allocation6], %s155
          %s158 = ssub.s32 2048, 2048
          %159 = vsyncadd %s153, %s158
          %s160 = smul.addr %s21, 16
          %s161 = smul.addr %s160, 128
          %s162 = scalar_lea.hbm %s1, %s161
          %s163 = sshll.u32 %s156, 4
          %s164 = int_to_ptr.vmem [resolvable:$true] %s163
          %169 = dma.hbm_to_vmem [thread:$0]  %s162, 2048, %s164, %s153, 128, 128, 8
        $region24: #{tpu_custom_call.1} parent=15 // pred_fallthru
          _
      $region16: #{tpu_custom_call.1} parent=5 // pred_fallthru
        _
      %p170 = scmp.le.s32.totalorder 1, %s14
      %p171 = scmp.lt.s32.totalorder %s14, 3
      %p172 = pnand %p170, %p171
      %p173 = pneg %p172
      // Predicated region
      $region25: #{tpu_custom_call.1} parent=5 // pred_check
        _
      $region26: #{tpu_custom_call.1} parent=5 // pred_check_branch
        %175 = sbr.rel (%p172) target = $region28
      $region27: #{tpu_custom_call.1} parent=5 // pred_region
        %s176 = ssub.s32 %s14, 1
        %s177 = sand.u32 %s41, 1
        %s178 = scalar_lea.sflag [#allocation5], %s177
        %s179 = sand.u32 %s41, 1
        %s180 = smul.addr %s179, 512
        %s181 = scalar_lea.vmem [#allocation4], %s180
        // Predicated region
        $region29: #{tpu_custom_call.1} parent=27 // pred_check
          %p182 = pneg %p54
        $region30: #{tpu_custom_call.1} parent=27 // pred_check_branch
          %184 = sbr.rel (%p182) target = $region32
        $region31: #{tpu_custom_call.1} parent=27 // pred_region
          %185 = dma.done %s178, 8192
        $region32: #{tpu_custom_call.1} parent=27 // pred_fallthru
          _
        %s186 = sand.u32 %s67, 1
        %s187 = scalar_lea.sflag [#allocation7], %s186
        %s188 = sand.u32 %s67, 1
        %s189 = smul.addr %s188, 128
        %s190 = scalar_lea.vmem [#allocation6], %s189
        // Predicated region
        $region33: #{tpu_custom_call.1} parent=27 // pred_check
          %p191 = pneg %p80
        $region34: #{tpu_custom_call.1} parent=27 // pred_check_branch
          %193 = sbr.rel (%p191) target = $region36
        $region35: #{tpu_custom_call.1} parent=27 // pred_region
          %194 = dma.done %s187, 2048
        $region36: #{tpu_custom_call.1} parent=27 // pred_fallthru
          _
        %s195 = sand.u32 %s41, 1
        %s196 = scalar_lea.sflag [#allocation5], %s195
        %s197 = sand.u32 %s41, 1
        %s198 = smul.addr %s197, 512
        %s199 = scalar_lea.vmem [#allocation4], %s198
        %p200 = pneg %p54
        %p201 = pneg %p51
        %s202 = sand.u32 %s67, 1
        %s203 = scalar_lea.sflag [#allocation7], %s202
        %s204 = sand.u32 %s67, 1
        %s205 = smul.addr %s204, 128
        %s206 = scalar_lea.vmem [#allocation6], %s205
        %p207 = pneg %p80
        %p208 = pneg %p77
        %p209 = pneg %p106
        %p210 = pneg %p103
        %p211 = scmp.lt.s32.totalorder %s23, 1
        %s212 = scalar_select %p211, %s23, 1
        %s213 = smul.addr %s212, 4
        %s214 = scalar_lea.vmem %s2, %s213
        %s215 = smul.u32 4, %s24
        %p216 = scmp.lt.s32.totalorder %s23, 1
        %s217 = scalar_select %p216, %s23, 1
        %s218 = smul.addr %s217, 4
        %s219 = scalar_lea.vmem %s2, %s218
        %p220 = scmp.eq.s32.totalorder %s24, 0
        // Predicated region
        $region37: #{tpu_custom_call.1} parent=27 // pred_check
          %p221 = pneg %p220
        $region38: #{tpu_custom_call.1} parent=27 // pred_check_branch
          %223 = sbr.rel (%p221) target = $region40
        $region39: #{tpu_custom_call.1} parent=27 // pred_region
          %224 = vst [vmem:[#allocation2] sm:$0xff] -inf
          %225 = vst [vmem:[#allocation2 + $0x8] sm:$0xff] -inf
          %226 = vst [vmem:[#allocation2 + $0x10] sm:$0xff] -inf
          %227 = vst [vmem:[#allocation2 + $0x18] sm:$0xff] -inf
          %228 = vst [vmem:[#allocation2 + $0x20] sm:$0xff] -inf
          %229 = vst [vmem:[#allocation2 + $0x28] sm:$0xff] -inf
          %230 = vst [vmem:[#allocation2 + $0x30] sm:$0xff] -inf
          %231 = vst [vmem:[#allocation2 + $0x38] sm:$0xff] -inf
          %232 = vst [vmem:[#allocation2 + $0x40] sm:$0xff] -inf
          %233 = vst [vmem:[#allocation2 + $0x48] sm:$0xff] -inf
          %234 = vst [vmem:[#allocation2 + $0x50] sm:$0xff] -inf
          %235 = vst [vmem:[#allocation2 + $0x58] sm:$0xff] -inf
          %236 = vst [vmem:[#allocation2 + $0x60] sm:$0xff] -inf
          %237 = vst [vmem:[#allocation2 + $0x68] sm:$0xff] -inf
          %238 = vst [vmem:[#allocation2 + $0x70] sm:$0xff] -inf
          %239 = vst [vmem:[#allocation2 + $0x78] sm:$0xff] -inf
          %240 = vst [vmem:[#allocation3] sm:$0xff] 0.0
          %241 = vst [vmem:[#allocation3 + $0x8] sm:$0xff] 0.0
          %242 = vst [vmem:[#allocation3 + $0x10] sm:$0xff] 0.0
          %243 = vst [vmem:[#allocation3 + $0x18] sm:$0xff] 0.0
          %244 = vst [vmem:[#allocation3 + $0x20] sm:$0xff] 0.0
          %245 = vst [vmem:[#allocation3 + $0x28] sm:$0xff] 0.0
          %246 = vst [vmem:[#allocation3 + $0x30] sm:$0xff] 0.0
          %247 = vst [vmem:[#allocation3 + $0x38] sm:$0xff] 0.0
          %248 = vst [vmem:[#allocation3 + $0x40] sm:$0xff] 0.0
          %249 = vst [vmem:[#allocation3 + $0x48] sm:$0xff] 0.0
          %250 = vst [vmem:[#allocation3 + $0x50] sm:$0xff] 0.0
          %251 = vst [vmem:[#allocation3 + $0x58] sm:$0xff] 0.0
          %252 = vst [vmem:[#allocation3 + $0x60] sm:$0xff] 0.0
          %253 = vst [vmem:[#allocation3 + $0x68] sm:$0xff] 0.0
          %254 = vst [vmem:[#allocation3 + $0x70] sm:$0xff] 0.0
          %255 = vst [vmem:[#allocation3 + $0x78] sm:$0xff] 0.0
        $region40: #{tpu_custom_call.1} parent=27 // pred_fallthru
          _
        %s256 = smul.u32 %s24, 4
        %v257 = vld [vmem:[%s181] sm:$0xff]
        %v258 = vld [vmem:[%s181 + $0x8] sm:$0xff]
        %v259 = vld [vmem:[%s181 + $0x10] sm:$0xff]
        %v260 = vld [vmem:[%s181 + $0x18] sm:$0xff]
        %v261 = vld [vmem:[%s181 + $0x20] sm:$0xff]
        %v262 = vld [vmem:[%s181 + $0x28] sm:$0xff]
        %v263 = vld [vmem:[%s181 + $0x30] sm:$0xff]
        %v264 = vld [vmem:[%s181 + $0x38] sm:$0xff]
        %v265 = vld [vmem:[%s181 + $0x40] sm:$0xff]
        %v266 = vld [vmem:[%s181 + $0x48] sm:$0xff]
        %v267 = vld [vmem:[%s181 + $0x50] sm:$0xff]
        %v268 = vld [vmem:[%s181 + $0x58] sm:$0xff]
        %v269 = vld [vmem:[%s181 + $0x60] sm:$0xff]
        %v270 = vld [vmem:[%s181 + $0x68] sm:$0xff]
        %v271 = vld [vmem:[%s181 + $0x70] sm:$0xff]
        %v272 = vld [vmem:[%s181 + $0x78] sm:$0xff]
        %v273 = vld [vmem:[#allocation2] sm:$0xff]
        %v274 = vld [vmem:[#allocation2 + $0x8] sm:$0xff]
        %v275 = vld [vmem:[#allocation2 + $0x10] sm:$0xff]
        %v276 = vld [vmem:[#allocation2 + $0x18] sm:$0xff]
        %v277 = vld [vmem:[#allocation2 + $0x20] sm:$0xff]
        %v278 = vld [vmem:[#allocation2 + $0x28] sm:$0xff]
        %v279 = vld [vmem:[#allocation2 + $0x30] sm:$0xff]
        %v280 = vld [vmem:[#allocation2 + $0x38] sm:$0xff]
        %v281 = vld [vmem:[#allocation2 + $0x40] sm:$0xff]
        %v282 = vld [vmem:[#allocation2 + $0x48] sm:$0xff]
        %v283 = vld [vmem:[#allocation2 + $0x50] sm:$0xff]
        %v284 = vld [vmem:[#allocation2 + $0x58] sm:$0xff]
        %v285 = vld [vmem:[#allocation2 + $0x60] sm:$0xff]
        %v286 = vld [vmem:[#allocation2 + $0x68] sm:$0xff]
        %v287 = vld [vmem:[#allocation2 + $0x70] sm:$0xff]
        %v288 = vld [vmem:[#allocation2 + $0x78] sm:$0xff]
        %vm289 = vcmp.gt.f32.partialorder %v257, %v273
        %vm290 = vcmp.gt.f32.partialorder %v258, %v274
        %vm291 = vcmp.gt.f32.partialorder %v259, %v275
        %vm292 = vcmp.gt.f32.partialorder %v260, %v276
        %vm293 = vcmp.gt.f32.partialorder %v261, %v277
        %vm294 = vcmp.gt.f32.partialorder %v262, %v278
        %vm295 = vcmp.gt.f32.partialorder %v263, %v279
        %vm296 = vcmp.gt.f32.partialorder %v264, %v280
        %vm297 = vcmp.gt.f32.partialorder %v265, %v281
        %vm298 = vcmp.gt.f32.partialorder %v266, %v282
        %vm299 = vcmp.gt.f32.partialorder %v267, %v283
        %vm300 = vcmp.gt.f32.partialorder %v268, %v284
        %vm301 = vcmp.gt.f32.partialorder %v269, %v285
        %vm302 = vcmp.gt.f32.partialorder %v270, %v286
        %vm303 = vcmp.gt.f32.partialorder %v271, %v287
        %vm304 = vcmp.gt.f32.partialorder %v272, %v288
        %v305 = vsel %vm289, %v257, %v273
        %v306 = vsel %vm290, %v258, %v274
        %v307 = vsel %vm291, %v259, %v275
        %v308 = vsel %vm292, %v260, %v276
        %v309 = vsel %vm293, %v261, %v277
        %v310 = vsel %vm294, %v262, %v278
        %v311 = vsel %vm295, %v263, %v279
        %v312 = vsel %vm296, %v264, %v280
        %v313 = vsel %vm297, %v265, %v281
        %v314 = vsel %vm298, %v266, %v282
        %v315 = vsel %vm299, %v267, %v283
        %v316 = vsel %vm300, %v268, %v284
        %v317 = vsel %vm301, %v269, %v285
        %v318 = vsel %vm302, %v270, %v286
        %v319 = vsel %vm303, %v271, %v287
        %v320 = vsel %vm304, %v272, %v288
        %321 = vst [vmem:[#allocation2] sm:$0xff] %v305
        %322 = vst [vmem:[#allocation2 + $0x8] sm:$0xff] %v306
        %323 = vst [vmem:[#allocation2 + $0x10] sm:$0xff] %v307
        %324 = vst [vmem:[#allocation2 + $0x18] sm:$0xff] %v308
        %325 = vst [vmem:[#allocation2 + $0x20] sm:$0xff] %v309
        %326 = vst [vmem:[#allocation2 + $0x28] sm:$0xff] %v310
        %327 = vst [vmem:[#allocation2 + $0x30] sm:$0xff] %v311
        %328 = vst [vmem:[#allocation2 + $0x38] sm:$0xff] %v312
        %329 = vst [vmem:[#allocation2 + $0x40] sm:$0xff] %v313
        %330 = vst [vmem:[#allocation2 + $0x48] sm:$0xff] %v314
        %331 = vst [vmem:[#allocation2 + $0x50] sm:$0xff] %v315
        %332 = vst [vmem:[#allocation2 + $0x58] sm:$0xff] %v316
        %333 = vst [vmem:[#allocation2 + $0x60] sm:$0xff] %v317
        %334 = vst [vmem:[#allocation2 + $0x68] sm:$0xff] %v318
        %335 = vst [vmem:[#allocation2 + $0x70] sm:$0xff] %v319
        %336 = vst [vmem:[#allocation2 + $0x78] sm:$0xff] %v320
        %s337 = scvt.s32.f32 %s256
        %v338 = vld [vmem:[#allocation3] sm:$0xff]
        %v339 = vld [vmem:[#allocation3 + $0x8] sm:$0xff]
        %v340 = vld [vmem:[#allocation3 + $0x10] sm:$0xff]
        %v341 = vld [vmem:[#allocation3 + $0x18] sm:$0xff]
        %v342 = vld [vmem:[#allocation3 + $0x20] sm:$0xff]
        %v343 = vld [vmem:[#allocation3 + $0x28] sm:$0xff]
        %v344 = vld [vmem:[#allocation3 + $0x30] sm:$0xff]
        %v345 = vld [vmem:[#allocation3 + $0x38] sm:$0xff]
        %v346 = vld [vmem:[#allocation3 + $0x40] sm:$0xff]
        %v347 = vld [vmem:[#allocation3 + $0x48] sm:$0xff]
        %v348 = vld [vmem:[#allocation3 + $0x50] sm:$0xff]
        %v349 = vld [vmem:[#allocation3 + $0x58] sm:$0xff]
        %v350 = vld [vmem:[#allocation3 + $0x60] sm:$0xff]
        %v351 = vld [vmem:[#allocation3 + $0x68] sm:$0xff]
        %v352 = vld [vmem:[#allocation3 + $0x70] sm:$0xff]
        %v353 = vld [vmem:[#allocation3 + $0x78] sm:$0xff]
        %v354 = vstv %s337
        %v355 = vsel %vm289, %v354, %v338
        %v356 = vsel %vm290, %v354, %v339
        %v357 = vsel %vm291, %v354, %v340
        %v358 = vsel %vm292, %v354, %v341
        %v359 = vsel %vm293, %v354, %v342
        %v360 = vsel %vm294, %v354, %v343
        %v361 = vsel %vm295, %v354, %v344
        %v362 = vsel %vm296, %v354, %v345
        %v363 = vsel %vm297, %v354, %v346
        %v364 = vsel %vm298, %v354, %v347
        %v365 = vsel %vm299, %v354, %v348
        %v366 = vsel %vm300, %v354, %v349
        %v367 = vsel %vm301, %v354, %v350
        %v368 = vsel %vm302, %v354, %v351
        %v369 = vsel %vm303, %v354, %v352
        %v370 = vsel %vm304, %v354, %v353
        %371 = vst [vmem:[#allocation3] sm:$0xff] %v355
        %372 = vst [vmem:[#allocation3 + $0x8] sm:$0xff] %v356
        %373 = vst [vmem:[#allocation3 + $0x10] sm:$0xff] %v357
        %374 = vst [vmem:[#allocation3 + $0x18] sm:$0xff] %v358
        %375 = vst [vmem:[#allocation3 + $0x20] sm:$0xff] %v359
        %376 = vst [vmem:[#allocation3 + $0x28] sm:$0xff] %v360
        %377 = vst [vmem:[#allocation3 + $0x30] sm:$0xff] %v361
        %378 = vst [vmem:[#allocation3 + $0x38] sm:$0xff] %v362
        %379 = vst [vmem:[#allocation3 + $0x40] sm:$0xff] %v363
        %380 = vst [vmem:[#allocation3 + $0x48] sm:$0xff] %v364
        %381 = vst [vmem:[#allocation3 + $0x50] sm:$0xff] %v365
        %382 = vst [vmem:[#allocation3 + $0x58] sm:$0xff] %v366
        %383 = vst [vmem:[#allocation3 + $0x60] sm:$0xff] %v367
        %384 = vst [vmem:[#allocation3 + $0x68] sm:$0xff] %v368
        %385 = vst [vmem:[#allocation3 + $0x70] sm:$0xff] %v369
        %386 = vst [vmem:[#allocation3 + $0x78] sm:$0xff] %v370
        %s387 = scalar_lea.vmem %s181, 128 [#allocation4]
        %v388 = vld [vmem:[%s387] sm:$0xff]
        %v389 = vld [vmem:[%s387 + $0x8] sm:$0xff]
        %v390 = vld [vmem:[%s387 + $0x10] sm:$0xff]
        %v391 = vld [vmem:[%s387 + $0x18] sm:$0xff]
        %v392 = vld [vmem:[%s387 + $0x20] sm:$0xff]
        %v393 = vld [vmem:[%s387 + $0x28] sm:$0xff]
        %v394 = vld [vmem:[%s387 + $0x30] sm:$0xff]
        %v395 = vld [vmem:[%s387 + $0x38] sm:$0xff]
        %v396 = vld [vmem:[%s387 + $0x40] sm:$0xff]
        %v397 = vld [vmem:[%s387 + $0x48] sm:$0xff]
        %v398 = vld [vmem:[%s387 + $0x50] sm:$0xff]
        %v399 = vld [vmem:[%s387 + $0x58] sm:$0xff]
        %v400 = vld [vmem:[%s387 + $0x60] sm:$0xff]
        %v401 = vld [vmem:[%s387 + $0x68] sm:$0xff]
        %v402 = vld [vmem:[%s387 + $0x70] sm:$0xff]
        %v403 = vld [vmem:[%s387 + $0x78] sm:$0xff]
        %v404 = vld [vmem:[#allocation2] sm:$0xff]
        %v405 = vld [vmem:[#allocation2 + $0x8] sm:$0xff]
        %v406 = vld [vmem:[#allocation2 + $0x10] sm:$0xff]
        %v407 = vld [vmem:[#allocation2 + $0x18] sm:$0xff]
        %v408 = vld [vmem:[#allocation2 + $0x20] sm:$0xff]
        %v409 = vld [vmem:[#allocation2 + $0x28] sm:$0xff]
        %v410 = vld [vmem:[#allocation2 + $0x30] sm:$0xff]
        %v411 = vld [vmem:[#allocation2 + $0x38] sm:$0xff]
        %v412 = vld [vmem:[#allocation2 + $0x40] sm:$0xff]
        %v413 = vld [vmem:[#allocation2 + $0x48] sm:$0xff]
        %v414 = vld [vmem:[#allocation2 + $0x50] sm:$0xff]
        %v415 = vld [vmem:[#allocation2 + $0x58] sm:$0xff]
        %v416 = vld [vmem:[#allocation2 + $0x60] sm:$0xff]
        %v417 = vld [vmem:[#allocation2 + $0x68] sm:$0xff]
        %v418 = vld [vmem:[#allocation2 + $0x70] sm:$0xff]
        %v419 = vld [vmem:[#allocation2 + $0x78] sm:$0xff]
        %vm420 = vcmp.gt.f32.partialorder %v388, %v404
        %vm421 = vcmp.gt.f32.partialorder %v389, %v405
        %vm422 = vcmp.gt.f32.partialorder %v390, %v406
        %vm423 = vcmp.gt.f32.partialorder %v391, %v407
        %vm424 = vcmp.gt.f32.partialorder %v392, %v408
        %vm425 = vcmp.gt.f32.partialorder %v393, %v409
        %vm426 = vcmp.gt.f32.partialorder %v394, %v410
        %vm427 = vcmp.gt.f32.partialorder %v395, %v411
        %vm428 = vcmp.gt.f32.partialorder %v396, %v412
        %vm429 = vcmp.gt.f32.partialorder %v397, %v413
        %vm430 = vcmp.gt.f32.partialorder %v398, %v414
        %vm431 = vcmp.gt.f32.partialorder %v399, %v415
        %vm432 = vcmp.gt.f32.partialorder %v400, %v416
        %vm433 = vcmp.gt.f32.partialorder %v401, %v417
        %vm434 = vcmp.gt.f32.partialorder %v402, %v418
        %vm435 = vcmp.gt.f32.partialorder %v403, %v419
        %v436 = vsel %vm420, %v388, %v404
        %v437 = vsel %vm421, %v389, %v405
        %v438 = vsel %vm422, %v390, %v406
        %v439 = vsel %vm423, %v391, %v407
        %v440 = vsel %vm424, %v392, %v408
        %v441 = vsel %vm425, %v393, %v409
        %v442 = vsel %vm426, %v394, %v410
        %v443 = vsel %vm427, %v395, %v411
        %v444 = vsel %vm428, %v396, %v412
        %v445 = vsel %vm429, %v397, %v413
        %v446 = vsel %vm430, %v398, %v414
        %v447 = vsel %vm431, %v399, %v415
        %v448 = vsel %vm432, %v400, %v416
        %v449 = vsel %vm433, %v401, %v417
        %v450 = vsel %vm434, %v402, %v418
        %v451 = vsel %vm435, %v403, %v419
        %452 = vst [vmem:[#allocation2] sm:$0xff] %v436
        %453 = vst [vmem:[#allocation2 + $0x8] sm:$0xff] %v437
        %454 = vst [vmem:[#allocation2 + $0x10] sm:$0xff] %v438
        %455 = vst [vmem:[#allocation2 + $0x18] sm:$0xff] %v439
        %456 = vst [vmem:[#allocation2 + $0x20] sm:$0xff] %v440
        %457 = vst [vmem:[#allocation2 + $0x28] sm:$0xff] %v441
        %458 = vst [vmem:[#allocation2 + $0x30] sm:$0xff] %v442
        %459 = vst [vmem:[#allocation2 + $0x38] sm:$0xff] %v443
        %460 = vst [vmem:[#allocation2 + $0x40] sm:$0xff] %v444
        %461 = vst [vmem:[#allocation2 + $0x48] sm:$0xff] %v445
        %462 = vst [vmem:[#allocation2 + $0x50] sm:$0xff] %v446
        %463 = vst [vmem:[#allocation2 + $0x58] sm:$0xff] %v447
        %464 = vst [vmem:[#allocation2 + $0x60] sm:$0xff] %v448
        %465 = vst [vmem:[#allocation2 + $0x68] sm:$0xff] %v449
        %466 = vst [vmem:[#allocation2 + $0x70] sm:$0xff] %v450
        %467 = vst [vmem:[#allocation2 + $0x78] sm:$0xff] %v451
        %s468 = sadd.s32 %s256, 1
        %s469 = scvt.s32.f32 %s468
        %v470 = vld [vmem:[#allocation3] sm:$0xff]
        %v471 = vld [vmem:[#allocation3 + $0x8] sm:$0xff]
        %v472 = vld [vmem:[#allocation3 + $0x10] sm:$0xff]
        %v473 = vld [vmem:[#allocation3 + $0x18] sm:$0xff]
        %v474 = vld [vmem:[#allocation3 + $0x20] sm:$0xff]
        %v475 = vld [vmem:[#allocation3 + $0x28] sm:$0xff]
        %v476 = vld [vmem:[#allocation3 + $0x30] sm:$0xff]
        %v477 = vld [vmem:[#allocation3 + $0x38] sm:$0xff]
        %v478 = vld [vmem:[#allocation3 + $0x40] sm:$0xff]
        %v479 = vld [vmem:[#allocation3 + $0x48] sm:$0xff]
        %v480 = vld [vmem:[#allocation3 + $0x50] sm:$0xff]
        %v481 = vld [vmem:[#allocation3 + $0x58] sm:$0xff]
        %v482 = vld [vmem:[#allocation3 + $0x60] sm:$0xff]
        %v483 = vld [vmem:[#allocation3 + $0x68] sm:$0xff]
        %v484 = vld [vmem:[#allocation3 + $0x70] sm:$0xff]
        %v485 = vld [vmem:[#allocation3 + $0x78] sm:$0xff]
        %v486 = vstv %s469
        %v487 = vsel %vm420, %v486, %v470
        %v488 = vsel %vm421, %v486, %v471
        %v489 = vsel %vm422, %v486, %v472
        %v490 = vsel %vm423, %v486, %v473
        %v491 = vsel %vm424, %v486, %v474
        %v492 = vsel %vm425, %v486, %v475
        %v493 = vsel %vm426, %v486, %v476
        %v494 = vsel %vm427, %v486, %v477
        %v495 = vsel %vm428, %v486, %v478
        %v496 = vsel %vm429, %v486, %v479
        %v497 = vsel %vm430, %v486, %v480
        %v498 = vsel %vm431, %v486, %v481
        %v499 = vsel %vm432, %v486, %v482
        %v500 = vsel %vm433, %v486, %v483
        %v501 = vsel %vm434, %v486, %v484
        %v502 = vsel %vm435, %v486, %v485
        %503 = vst [vmem:[#allocation3] sm:$0xff] %v487
        %504 = vst [vmem:[#allocation3 + $0x8] sm:$0xff] %v488
        %505 = vst [vmem:[#allocation3 + $0x10] sm:$0xff] %v489
        %506 = vst [vmem:[#allocation3 + $0x18] sm:$0xff] %v490
        %507 = vst [vmem:[#allocation3 + $0x20] sm:$0xff] %v491
        %508 = vst [vmem:[#allocation3 + $0x28] sm:$0xff] %v492
        %509 = vst [vmem:[#allocation3 + $0x30] sm:$0xff] %v493
        %510 = vst [vmem:[#allocation3 + $0x38] sm:$0xff] %v494
        %511 = vst [vmem:[#allocation3 + $0x40] sm:$0xff] %v495
        %512 = vst [vmem:[#allocation3 + $0x48] sm:$0xff] %v496
        %513 = vst [vmem:[#allocation3 + $0x50] sm:$0xff] %v497
        %514 = vst [vmem:[#allocation3 + $0x58] sm:$0xff] %v498
        %515 = vst [vmem:[#allocation3 + $0x60] sm:$0xff] %v499
        %516 = vst [vmem:[#allocation3 + $0x68] sm:$0xff] %v500
        %517 = vst [vmem:[#allocation3 + $0x70] sm:$0xff] %v501
        %518 = vst [vmem:[#allocation3 + $0x78] sm:$0xff] %v502
        %s519 = scalar_lea.vmem %s181, 256 [#allocation4]
        %v520 = vld [vmem:[%s519] sm:$0xff]
        %v521 = vld [vmem:[%s519 + $0x8] sm:$0xff]
        %v522 = vld [vmem:[%s519 + $0x10] sm:$0xff]
        %v523 = vld [vmem:[%s519 + $0x18] sm:$0xff]
        %v524 = vld [vmem:[%s519 + $0x20] sm:$0xff]
        %v525 = vld [vmem:[%s519 + $0x28] sm:$0xff]
        %v526 = vld [vmem:[%s519 + $0x30] sm:$0xff]
        %v527 = vld [vmem:[%s519 + $0x38] sm:$0xff]
        %v528 = vld [vmem:[%s519 + $0x40] sm:$0xff]
        %v529 = vld [vmem:[%s519 + $0x48] sm:$0xff]
        %v530 = vld [vmem:[%s519 + $0x50] sm:$0xff]
        %v531 = vld [vmem:[%s519 + $0x58] sm:$0xff]
        %v532 = vld [vmem:[%s519 + $0x60] sm:$0xff]
        %v533 = vld [vmem:[%s519 + $0x68] sm:$0xff]
        %v534 = vld [vmem:[%s519 + $0x70] sm:$0xff]
        %v535 = vld [vmem:[%s519 + $0x78] sm:$0xff]
        %v536 = vld [vmem:[#allocation2] sm:$0xff]
        %v537 = vld [vmem:[#allocation2 + $0x8] sm:$0xff]
        %v538 = vld [vmem:[#allocation2 + $0x10] sm:$0xff]
        %v539 = vld [vmem:[#allocation2 + $0x18] sm:$0xff]
        %v540 = vld [vmem:[#allocation2 + $0x20] sm:$0xff]
        %v541 = vld [vmem:[#allocation2 + $0x28] sm:$0xff]
        %v542 = vld [vmem:[#allocation2 + $0x30] sm:$0xff]
        %v543 = vld [vmem:[#allocation2 + $0x38] sm:$0xff]
        %v544 = vld [vmem:[#allocation2 + $0x40] sm:$0xff]
        %v545 = vld [vmem:[#allocation2 + $0x48] sm:$0xff]
        %v546 = vld [vmem:[#allocation2 + $0x50] sm:$0xff]
        %v547 = vld [vmem:[#allocation2 + $0x58] sm:$0xff]
        %v548 = vld [vmem:[#allocation2 + $0x60] sm:$0xff]
        %v549 = vld [vmem:[#allocation2 + $0x68] sm:$0xff]
        %v550 = vld [vmem:[#allocation2 + $0x70] sm:$0xff]
        %v551 = vld [vmem:[#allocation2 + $0x78] sm:$0xff]
        %vm552 = vcmp.gt.f32.partialorder %v520, %v536
        %vm553 = vcmp.gt.f32.partialorder %v521, %v537
        %vm554 = vcmp.gt.f32.partialorder %v522, %v538
        %vm555 = vcmp.gt.f32.partialorder %v523, %v539
        %vm556 = vcmp.gt.f32.partialorder %v524, %v540
        %vm557 = vcmp.gt.f32.partialorder %v525, %v541
        %vm558 = vcmp.gt.f32.partialorder %v526, %v542
        %vm559 = vcmp.gt.f32.partialorder %v527, %v543
        %vm560 = vcmp.gt.f32.partialorder %v528, %v544
        %vm561 = vcmp.gt.f32.partialorder %v529, %v545
        %vm562 = vcmp.gt.f32.partialorder %v530, %v546
        %vm563 = vcmp.gt.f32.partialorder %v531, %v547
        %vm564 = vcmp.gt.f32.partialorder %v532, %v548
        %vm565 = vcmp.gt.f32.partialorder %v533, %v549
        %vm566 = vcmp.gt.f32.partialorder %v534, %v550
        %vm567 = vcmp.gt.f32.partialorder %v535, %v551
        %v568 = vsel %vm552, %v520, %v536
        %v569 = vsel %vm553, %v521, %v537
        %v570 = vsel %vm554, %v522, %v538
        %v571 = vsel %vm555, %v523, %v539
        %v572 = vsel %vm556, %v524, %v540
        %v573 = vsel %vm557, %v525, %v541
        %v574 = vsel %vm558, %v526, %v542
        %v575 = vsel %vm559, %v527, %v543
        %v576 = vsel %vm560, %v528, %v544
        %v577 = vsel %vm561, %v529, %v545
        %v578 = vsel %vm562, %v530, %v546
        %v579 = vsel %vm563, %v531, %v547
        %v580 = vsel %vm564, %v532, %v548
        %v581 = vsel %vm565, %v533, %v549
        %v582 = vsel %vm566, %v534, %v550
        %v583 = vsel %vm567, %v535, %v551
        %584 = vst [vmem:[#allocation2] sm:$0xff] %v568
        %585 = vst [vmem:[#allocation2 + $0x8] sm:$0xff] %v569
        %586 = vst [vmem:[#allocation2 + $0x10] sm:$0xff] %v570
        %587 = vst [vmem:[#allocation2 + $0x18] sm:$0xff] %v571
        %588 = vst [vmem:[#allocation2 + $0x20] sm:$0xff] %v572
        %589 = vst [vmem:[#allocation2 + $0x28] sm:$0xff] %v573
        %590 = vst [vmem:[#allocation2 + $0x30] sm:$0xff] %v574
        %591 = vst [vmem:[#allocation2 + $0x38] sm:$0xff] %v575
        %592 = vst [vmem:[#allocation2 + $0x40] sm:$0xff] %v576
        %593 = vst [vmem:[#allocation2 + $0x48] sm:$0xff] %v577
        %594 = vst [vmem:[#allocation2 + $0x50] sm:$0xff] %v578
        %595 = vst [vmem:[#allocation2 + $0x58] sm:$0xff] %v579
        %596 = vst [vmem:[#allocation2 + $0x60] sm:$0xff] %v580
        %597 = vst [vmem:[#allocation2 + $0x68] sm:$0xff] %v581
        %598 = vst [vmem:[#allocation2 + $0x70] sm:$0xff] %v582
        %599 = vst [vmem:[#allocation2 + $0x78] sm:$0xff] %v583
        %s600 = sadd.s32 %s256, 2
        %s601 = scvt.s32.f32 %s600
        %v602 = vld [vmem:[#allocation3] sm:$0xff]
        %v603 = vld [vmem:[#allocation3 + $0x8] sm:$0xff]
        %v604 = vld [vmem:[#allocation3 + $0x10] sm:$0xff]
        %v605 = vld [vmem:[#allocation3 + $0x18] sm:$0xff]
        %v606 = vld [vmem:[#allocation3 + $0x20] sm:$0xff]
        %v607 = vld [vmem:[#allocation3 + $0x28] sm:$0xff]
        %v608 = vld [vmem:[#allocation3 + $0x30] sm:$0xff]
        %v609 = vld [vmem:[#allocation3 + $0x38] sm:$0xff]
        %v610 = vld [vmem:[#allocation3 + $0x40] sm:$0xff]
        %v611 = vld [vmem:[#allocation3 + $0x48] sm:$0xff]
        %v612 = vld [vmem:[#allocation3 + $0x50] sm:$0xff]
        %v613 = vld [vmem:[#allocation3 + $0x58] sm:$0xff]
        %v614 = vld [vmem:[#allocation3 + $0x60] sm:$0xff]
        %v615 = vld [vmem:[#allocation3 + $0x68] sm:$0xff]
        %v616 = vld [vmem:[#allocation3 + $0x70] sm:$0xff]
        %v617 = vld [vmem:[#allocation3 + $0x78] sm:$0xff]
        %v618 = vstv %s601
        %v619 = vsel %vm552, %v618, %v602
        %v620 = vsel %vm553, %v618, %v603
        %v621 = vsel %vm554, %v618, %v604
        %v622 = vsel %vm555, %v618, %v605
        %v623 = vsel %vm556, %v618, %v606
        %v624 = vsel %vm557, %v618, %v607
        %v625 = vsel %vm558, %v618, %v608
        %v626 = vsel %vm559, %v618, %v609
        %v627 = vsel %vm560, %v618, %v610
        %v628 = vsel %vm561, %v618, %v611
        %v629 = vsel %vm562, %v618, %v612
        %v630 = vsel %vm563, %v618, %v613
        %v631 = vsel %vm564, %v618, %v614
        %v632 = vsel %vm565, %v618, %v615
        %v633 = vsel %vm566, %v618, %v616
        %v634 = vsel %vm567, %v618, %v617
        %635 = vst [vmem:[#allocation3] sm:$0xff] %v619
        %636 = vst [vmem:[#allocation3 + $0x8] sm:$0xff] %v620
        %637 = vst [vmem:[#allocation3 + $0x10] sm:$0xff] %v621
        %638 = vst [vmem:[#allocation3 + $0x18] sm:$0xff] %v622
        %639 = vst [vmem:[#allocation3 + $0x20] sm:$0xff] %v623
        %640 = vst [vmem:[#allocation3 + $0x28] sm:$0xff] %v624
        %641 = vst [vmem:[#allocation3 + $0x30] sm:$0xff] %v625
        %642 = vst [vmem:[#allocation3 + $0x38] sm:$0xff] %v626
        %643 = vst [vmem:[#allocation3 + $0x40] sm:$0xff] %v627
        %644 = vst [vmem:[#allocation3 + $0x48] sm:$0xff] %v628
        %645 = vst [vmem:[#allocation3 + $0x50] sm:$0xff] %v629
        %646 = vst [vmem:[#allocation3 + $0x58] sm:$0xff] %v630
        %647 = vst [vmem:[#allocation3 + $0x60] sm:$0xff] %v631
        %648 = vst [vmem:[#allocation3 + $0x68] sm:$0xff] %v632
        %649 = vst [vmem:[#allocation3 + $0x70] sm:$0xff] %v633
        %650 = vst [vmem:[#allocation3 + $0x78] sm:$0xff] %v634
        %s651 = scalar_lea.vmem %s181, 384 [#allocation4]
        %v652 = vld [vmem:[%s651] sm:$0xff]
        %v653 = vld [vmem:[%s651 + $0x8] sm:$0xff]
        %v654 = vld [vmem:[%s651 + $0x10] sm:$0xff]
        %v655 = vld [vmem:[%s651 + $0x18] sm:$0xff]
        %v656 = vld [vmem:[%s651 + $0x20] sm:$0xff]
        %v657 = vld [vmem:[%s651 + $0x28] sm:$0xff]
        %v658 = vld [vmem:[%s651 + $0x30] sm:$0xff]
        %v659 = vld [vmem:[%s651 + $0x38] sm:$0xff]
        %v660 = vld [vmem:[%s651 + $0x40] sm:$0xff]
        %v661 = vld [vmem:[%s651 + $0x48] sm:$0xff]
        %v662 = vld [vmem:[%s651 + $0x50] sm:$0xff]
        %v663 = vld [vmem:[%s651 + $0x58] sm:$0xff]
        %v664 = vld [vmem:[%s651 + $0x60] sm:$0xff]
        %v665 = vld [vmem:[%s651 + $0x68] sm:$0xff]
        %v666 = vld [vmem:[%s651 + $0x70] sm:$0xff]
        %v667 = vld [vmem:[%s651 + $0x78] sm:$0xff]
        %v668 = vld [vmem:[#allocation2] sm:$0xff]
        %v669 = vld [vmem:[#allocation2 + $0x8] sm:$0xff]
        %v670 = vld [vmem:[#allocation2 + $0x10] sm:$0xff]
        %v671 = vld [vmem:[#allocation2 + $0x18] sm:$0xff]
        %v672 = vld [vmem:[#allocation2 + $0x20] sm:$0xff]
        %v673 = vld [vmem:[#allocation2 + $0x28] sm:$0xff]
        %v674 = vld [vmem:[#allocation2 + $0x30] sm:$0xff]
        %v675 = vld [vmem:[#allocation2 + $0x38] sm:$0xff]
        %v676 = vld [vmem:[#allocation2 + $0x40] sm:$0xff]
        %v677 = vld [vmem:[#allocation2 + $0x48] sm:$0xff]
        %v678 = vld [vmem:[#allocation2 + $0x50] sm:$0xff]
        %v679 = vld [vmem:[#allocation2 + $0x58] sm:$0xff]
        %v680 = vld [vmem:[#allocation2 + $0x60] sm:$0xff]
        %v681 = vld [vmem:[#allocation2 + $0x68] sm:$0xff]
        %v682 = vld [vmem:[#allocation2 + $0x70] sm:$0xff]
        %v683 = vld [vmem:[#allocation2 + $0x78] sm:$0xff]
        %vm684 = vcmp.gt.f32.partialorder %v652, %v668
        %vm685 = vcmp.gt.f32.partialorder %v653, %v669
        %vm686 = vcmp.gt.f32.partialorder %v654, %v670
        %vm687 = vcmp.gt.f32.partialorder %v655, %v671
        %vm688 = vcmp.gt.f32.partialorder %v656, %v672
        %vm689 = vcmp.gt.f32.partialorder %v657, %v673
        %vm690 = vcmp.gt.f32.partialorder %v658, %v674
        %vm691 = vcmp.gt.f32.partialorder %v659, %v675
        %vm692 = vcmp.gt.f32.partialorder %v660, %v676
        %vm693 = vcmp.gt.f32.partialorder %v661, %v677
        %vm694 = vcmp.gt.f32.partialorder %v662, %v678
        %vm695 = vcmp.gt.f32.partialorder %v663, %v679
        %vm696 = vcmp.gt.f32.partialorder %v664, %v680
        %vm697 = vcmp.gt.f32.partialorder %v665, %v681
        %vm698 = vcmp.gt.f32.partialorder %v666, %v682
        %vm699 = vcmp.gt.f32.partialorder %v667, %v683
        %v700 = vsel %vm684, %v652, %v668
        %v701 = vsel %vm685, %v653, %v669
        %v702 = vsel %vm686, %v654, %v670
        %v703 = vsel %vm687, %v655, %v671
        %v704 = vsel %vm688, %v656, %v672
        %v705 = vsel %vm689, %v657, %v673
        %v706 = vsel %vm690, %v658, %v674
        %v707 = vsel %vm691, %v659, %v675
        %v708 = vsel %vm692, %v660, %v676
        %v709 = vsel %vm693, %v661, %v677
        %v710 = vsel %vm694, %v662, %v678
        %v711 = vsel %vm695, %v663, %v679
        %v712 = vsel %vm696, %v664, %v680
        %v713 = vsel %vm697, %v665, %v681
        %v714 = vsel %vm698, %v666, %v682
        %v715 = vsel %vm699, %v667, %v683
        %716 = vst [vmem:[#allocation2] sm:$0xff] %v700
        %717 = vst [vmem:[#allocation2 + $0x8] sm:$0xff] %v701
        %718 = vst [vmem:[#allocation2 + $0x10] sm:$0xff] %v702
        %719 = vst [vmem:[#allocation2 + $0x18] sm:$0xff] %v703
        %720 = vst [vmem:[#allocation2 + $0x20] sm:$0xff] %v704
        %721 = vst [vmem:[#allocation2 + $0x28] sm:$0xff] %v705
        %722 = vst [vmem:[#allocation2 + $0x30] sm:$0xff] %v706
        %723 = vst [vmem:[#allocation2 + $0x38] sm:$0xff] %v707
        %724 = vst [vmem:[#allocation2 + $0x40] sm:$0xff] %v708
        %725 = vst [vmem:[#allocation2 + $0x48] sm:$0xff] %v709
        %726 = vst [vmem:[#allocation2 + $0x50] sm:$0xff] %v710
        %727 = vst [vmem:[#allocation2 + $0x58] sm:$0xff] %v711
        %728 = vst [vmem:[#allocation2 + $0x60] sm:$0xff] %v712
        %729 = vst [vmem:[#allocation2 + $0x68] sm:$0xff] %v713
        %730 = vst [vmem:[#allocation2 + $0x70] sm:$0xff] %v714
        %731 = vst [vmem:[#allocation2 + $0x78] sm:$0xff] %v715
        %s732 = sadd.s32 %s256, 3
        %s733 = scvt.s32.f32 %s732
        %v734 = vld [vmem:[#allocation3] sm:$0xff]
        %v735 = vld [vmem:[#allocation3 + $0x8] sm:$0xff]
        %v736 = vld [vmem:[#allocation3 + $0x10] sm:$0xff]
        %v737 = vld [vmem:[#allocation3 + $0x18] sm:$0xff]
        %v738 = vld [vmem:[#allocation3 + $0x20] sm:$0xff]
        %v739 = vld [vmem:[#allocation3 + $0x28] sm:$0xff]
        %v740 = vld [vmem:[#allocation3 + $0x30] sm:$0xff]
        %v741 = vld [vmem:[#allocation3 + $0x38] sm:$0xff]
        %v742 = vld [vmem:[#allocation3 + $0x40] sm:$0xff]
        %v743 = vld [vmem:[#allocation3 + $0x48] sm:$0xff]
        %v744 = vld [vmem:[#allocation3 + $0x50] sm:$0xff]
        %v745 = vld [vmem:[#allocation3 + $0x58] sm:$0xff]
        %v746 = vld [vmem:[#allocation3 + $0x60] sm:$0xff]
        %v747 = vld [vmem:[#allocation3 + $0x68] sm:$0xff]
        %v748 = vld [vmem:[#allocation3 + $0x70] sm:$0xff]
        %v749 = vld [vmem:[#allocation3 + $0x78] sm:$0xff]
        %v750 = vstv %s733
        %v751 = vsel %vm684, %v750, %v734
        %v752 = vsel %vm685, %v750, %v735
        %v753 = vsel %vm686, %v750, %v736
        %v754 = vsel %vm687, %v750, %v737
        %v755 = vsel %vm688, %v750, %v738
        %v756 = vsel %vm689, %v750, %v739
        %v757 = vsel %vm690, %v750, %v740
        %v758 = vsel %vm691, %v750, %v741
        %v759 = vsel %vm692, %v750, %v742
        %v760 = vsel %vm693, %v750, %v743
        %v761 = vsel %vm694, %v750, %v744
        %v762 = vsel %vm695, %v750, %v745
        %v763 = vsel %vm696, %v750, %v746
        %v764 = vsel %vm697, %v750, %v747
        %v765 = vsel %vm698, %v750, %v748
        %v766 = vsel %vm699, %v750, %v749
        %767 = vst [vmem:[#allocation3] sm:$0xff] %v751
        %768 = vst [vmem:[#allocation3 + $0x8] sm:$0xff] %v752
        %769 = vst [vmem:[#allocation3 + $0x10] sm:$0xff] %v753
        %770 = vst [vmem:[#allocation3 + $0x18] sm:$0xff] %v754
        %771 = vst [vmem:[#allocation3 + $0x20] sm:$0xff] %v755
        %772 = vst [vmem:[#allocation3 + $0x28] sm:$0xff] %v756
        %773 = vst [vmem:[#allocation3 + $0x30] sm:$0xff] %v757
        %774 = vst [vmem:[#allocation3 + $0x38] sm:$0xff] %v758
        %775 = vst [vmem:[#allocation3 + $0x40] sm:$0xff] %v759
        %776 = vst [vmem:[#allocation3 + $0x48] sm:$0xff] %v760
        %777 = vst [vmem:[#allocation3 + $0x50] sm:$0xff] %v761
        %778 = vst [vmem:[#allocation3 + $0x58] sm:$0xff] %v762
        %779 = vst [vmem:[#allocation3 + $0x60] sm:$0xff] %v763
        %780 = vst [vmem:[#allocation3 + $0x68] sm:$0xff] %v764
        %781 = vst [vmem:[#allocation3 + $0x70] sm:$0xff] %v765
        %782 = vst [vmem:[#allocation3 + $0x78] sm:$0xff] %v766
        // Predicated region
        $region41: #{tpu_custom_call.1} parent=27 // pred_check
          %p783 = pneg %p220
        $region42: #{tpu_custom_call.1} parent=27 // pred_check_branch
          %785 = sbr.rel (%p783) target = $region44
        $region43: #{tpu_custom_call.1} parent=27 // pred_region
          %v786 = vlaneseq
          %v787 = vshrl.u32 %v786, 7
          %v788 = vadd.s32 %v787, 8
          %v789 = vadd.s32 %v787, 16
          %v790 = vadd.s32 %v787, 24
          %v791 = vadd.s32 %v787, 32
          %v792 = vadd.s32 %v787, 40
          %v793 = vadd.s32 %v787, 48
          %v794 = vadd.s32 %v787, 56
          %v795 = vadd.s32 %v787, 64
          %v796 = vadd.s32 %v787, 72
          %v797 = vadd.s32 %v787, 80
          %v798 = vadd.s32 %v787, 88
          %v799 = vadd.s32 %v787, 96
          %v800 = vadd.s32 %v787, 104
          %v801 = vadd.s32 %v787, 112
          %v802 = vadd.s32 %v787, 120
          %v803 = vlaneseq
          %v804 = vand.u32 %v803, 127
          %v805 = vld [vmem:[%s190] sm:$0xff]
          %v806 = vld [vmem:[%s190 + $0x8] sm:$0xff]
          %v807 = vld [vmem:[%s190 + $0x10] sm:$0xff]
          %v808 = vld [vmem:[%s190 + $0x18] sm:$0xff]
          %v809 = vld [vmem:[%s190 + $0x20] sm:$0xff]
          %v810 = vld [vmem:[%s190 + $0x28] sm:$0xff]
          %v811 = vld [vmem:[%s190 + $0x30] sm:$0xff]
          %v812 = vld [vmem:[%s190 + $0x38] sm:$0xff]
          %v813 = vld [vmem:[%s190 + $0x40] sm:$0xff]
          %v814 = vld [vmem:[%s190 + $0x48] sm:$0xff]
          %v815 = vld [vmem:[%s190 + $0x50] sm:$0xff]
          %v816 = vld [vmem:[%s190 + $0x58] sm:$0xff]
          %v817 = vld [vmem:[%s190 + $0x60] sm:$0xff]
          %v818 = vld [vmem:[%s190 + $0x68] sm:$0xff]
          %v819 = vld [vmem:[%s190 + $0x70] sm:$0xff]
          %v820 = vld [vmem:[%s190 + $0x78] sm:$0xff]
          %vm821 = vcmp.eq.s32.totalorder %v787, 0
          %vm822 = vcmp.eq.s32.totalorder %v788, 0
          %vm823 = vcmp.eq.s32.totalorder %v789, 0
          %vm824 = vcmp.eq.s32.totalorder %v790, 0
          %vm825 = vcmp.eq.s32.totalorder %v791, 0
          %vm826 = vcmp.eq.s32.totalorder %v792, 0
          %vm827 = vcmp.eq.s32.totalorder %v793, 0
          %vm828 = vcmp.eq.s32.totalorder %v794, 0
          %vm829 = vcmp.eq.s32.totalorder %v795, 0
          %vm830 = vcmp.eq.s32.totalorder %v796, 0
          %vm831 = vcmp.eq.s32.totalorder %v797, 0
          %vm832 = vcmp.eq.s32.totalorder %v798, 0
          %vm833 = vcmp.eq.s32.totalorder %v799, 0
          %vm834 = vcmp.eq.s32.totalorder %v800, 0
          %vm835 = vcmp.eq.s32.totalorder %v801, 0
          %vm836 = vcmp.eq.s32.totalorder %v802, 0
          %v837 = vrot.slane %v805, 7
          %v838 = vrot.slane %v806, 7
          %v839 = vrot.slane %v807, 7
          %v840 = vrot.slane %v808, 7
          %v841 = vrot.slane %v809, 7
          %v842 = vrot.slane %v810, 7
          %v843 = vrot.slane %v811, 7
          %v844 = vrot.slane %v812, 7
          %v845 = vrot.slane %v813, 7
          %v846 = vrot.slane %v814, 7
          %v847 = vrot.slane %v815, 7
          %v848 = vrot.slane %v816, 7
          %v849 = vrot.slane %v817, 7
          %v850 = vrot.slane %v818, 7
          %v851 = vrot.slane %v819, 7
          %v852 = vrot.slane %v820, 7
          %vm853 = vcmp.lt.s32.totalorder %v787, 1
          %v854 = vsel %vm853, %v851, %v852
          %v855 = vsel %vm853, %v850, %v851
          %v856 = vsel %vm853, %v849, %v850
          %v857 = vsel %vm853, %v848, %v849
          %v858 = vsel %vm853, %v847, %v848
          %v859 = vsel %vm853, %v846, %v847
          %v860 = vsel %vm853, %v845, %v846
          %v861 = vsel %vm853, %v844, %v845
          %v862 = vsel %vm853, %v843, %v844
          %v863 = vsel %vm853, %v842, %v843
          %v864 = vsel %vm853, %v841, %v842
          %v865 = vsel %vm853, %v840, %v841
          %v866 = vsel %vm853, %v839, %v840
          %v867 = vsel %vm853, %v838, %v839
          %v868 = vsel %vm853, %v837, %v838
          %v869 = vsel %vm853, %v852, %v837
          %v870 = vsel %vm821, 0.0, %v869
          %v871 = vsel %vm822, 0.0, %v868
          %v872 = vsel %vm823, 0.0, %v867
          %v873 = vsel %vm824, 0.0, %v866
          %v874 = vsel %vm825, 0.0, %v865
          %v875 = vsel %vm826, 0.0, %v864
          %v876 = vsel %vm827, 0.0, %v863
          %v877 = vsel %vm828, 0.0, %v862
          %v878 = vsel %vm829, 0.0, %v861
          %v879 = vsel %vm830, 0.0, %v860
          %v880 = vsel %vm831, 0.0, %v859
          %v881 = vsel %vm832, 0.0, %v858
          %v882 = vsel %vm833, 0.0, %v857
          %v883 = vsel %vm834, 0.0, %v856
          %v884 = vsel %vm835, 0.0, %v855
          %v885 = vsel %vm836, 0.0, %v854
          %vm886 = vcmp.eq.s32.totalorder %v787, 127
          %vm887 = vcmp.eq.s32.totalorder %v788, 127
          %vm888 = vcmp.eq.s32.totalorder %v789, 127
          %vm889 = vcmp.eq.s32.totalorder %v790, 127
          %vm890 = vcmp.eq.s32.totalorder %v791, 127
          %vm891 = vcmp.eq.s32.totalorder %v792, 127
          %vm892 = vcmp.eq.s32.totalorder %v793, 127
          %vm893 = vcmp.eq.s32.totalorder %v794, 127
          %vm894 = vcmp.eq.s32.totalorder %v795, 127
          %vm895 = vcmp.eq.s32.totalorder %v796, 127
          %vm896 = vcmp.eq.s32.totalorder %v797, 127
          %vm897 = vcmp.eq.s32.totalorder %v798, 127
          %vm898 = vcmp.eq.s32.totalorder %v799, 127
          %vm899 = vcmp.eq.s32.totalorder %v800, 127
          %vm900 = vcmp.eq.s32.totalorder %v801, 127
          %vm901 = vcmp.eq.s32.totalorder %v802, 127
          %v902 = vrot.slane %v805, 1
          %v903 = vrot.slane %v806, 1
          %v904 = vrot.slane %v807, 1
          %v905 = vrot.slane %v808, 1
          %v906 = vrot.slane %v809, 1
          %v907 = vrot.slane %v810, 1
          %v908 = vrot.slane %v811, 1
          %v909 = vrot.slane %v812, 1
          %v910 = vrot.slane %v813, 1
          %v911 = vrot.slane %v814, 1
          %v912 = vrot.slane %v815, 1
          %v913 = vrot.slane %v816, 1
          %v914 = vrot.slane %v817, 1
          %v915 = vrot.slane %v818, 1
          %v916 = vrot.slane %v819, 1
          %v917 = vrot.slane %v820, 1
          %vm918 = vcmp.lt.s32.totalorder %v787, 7
          %v919 = vsel %vm918, %v916, %v917
          %v920 = vsel %vm918, %v915, %v916
          %v921 = vsel %vm918, %v914, %v915
          %v922 = vsel %vm918, %v913, %v914
          %v923 = vsel %vm918, %v912, %v913
          %v924 = vsel %vm918, %v911, %v912
          %v925 = vsel %vm918, %v910, %v911
          %v926 = vsel %vm918, %v909, %v910
          %v927 = vsel %vm918, %v908, %v909
          %v928 = vsel %vm918, %v907, %v908
          %v929 = vsel %vm918, %v906, %v907
          %v930 = vsel %vm918, %v905, %v906
          %v931 = vsel %vm918, %v904, %v905
          %v932 = vsel %vm918, %v903, %v904
          %v933 = vsel %vm918, %v902, %v903
          %v934 = vsel %vm918, %v917, %v902
          %v935 = vsel %vm886, 0.0, %v933
          %v936 = vsel %vm887, 0.0, %v932
          %v937 = vsel %vm888, 0.0, %v931
          %v938 = vsel %vm889, 0.0, %v930
          %v939 = vsel %vm890, 0.0, %v929
          %v940 = vsel %vm891, 0.0, %v928
          %v941 = vsel %vm892, 0.0, %v927
          %v942 = vsel %vm893, 0.0, %v926
          %v943 = vsel %vm894, 0.0, %v925
          %v944 = vsel %vm895, 0.0, %v924
          %v945 = vsel %vm896, 0.0, %v923
          %v946 = vsel %vm897, 0.0, %v922
          %v947 = vsel %vm898, 0.0, %v921
          %v948 = vsel %vm899, 0.0, %v920
          %v949 = vsel %vm900, 0.0, %v919
          %v950 = vsel %vm901, 0.0, %v934
          %v951 = vadd.f32 %v805, %v870
          %v952 = vadd.f32 %v806, %v871
          %v953 = vadd.f32 %v807, %v872
          %v954 = vadd.f32 %v808, %v873
          %v955 = vadd.f32 %v809, %v874
          %v956 = vadd.f32 %v810, %v875
          %v957 = vadd.f32 %v811, %v876
          %v958 = vadd.f32 %v812, %v877
          %v959 = vadd.f32 %v813, %v878
          %v960 = vadd.f32 %v814, %v879
          %v961 = vadd.f32 %v815, %v880
          %v962 = vadd.f32 %v816, %v881
          %v963 = vadd.f32 %v817, %v882
          %v964 = vadd.f32 %v818, %v883
          %v965 = vadd.f32 %v819, %v884
          %v966 = vadd.f32 %v820, %v885
          %v967 = vadd.f32 %v951, %v935
          %v968 = vadd.f32 %v952, %v936
          %v969 = vadd.f32 %v953, %v937
          %v970 = vadd.f32 %v954, %v938
          %v971 = vadd.f32 %v955, %v939
          %v972 = vadd.f32 %v956, %v940
          %v973 = vadd.f32 %v957, %v941
          %v974 = vadd.f32 %v958, %v942
          %v975 = vadd.f32 %v959, %v943
          %v976 = vadd.f32 %v960, %v944
          %v977 = vadd.f32 %v961, %v945
          %v978 = vadd.f32 %v962, %v946
          %v979 = vadd.f32 %v963, %v947
          %v980 = vadd.f32 %v964, %v948
          %v981 = vadd.f32 %v965, %v949
          %v982 = vadd.f32 %v966, %v950
          %vm983 = vcmp.eq.s32.totalorder %v804, 0
          %984 = vrot.lane.b32.xlu0 %v967, 1
          %v985 = vpop.permute.xlu0 %984
          %986 = vrot.lane.b32.xlu0 %v968, 1
          %v987 = vpop.permute.xlu0 %986
          %988 = vrot.lane.b32.xlu0 %v969, 1
          %v989 = vpop.permute.xlu0 %988
          %990 = vrot.lane.b32.xlu0 %v970, 1
          %v991 = vpop.permute.xlu0 %990
          %992 = vrot.lane.b32.xlu0 %v971, 1
          %v993 = vpop.permute.xlu0 %992
          %994 = vrot.lane.b32.xlu0 %v972, 1
          %v995 = vpop.permute.xlu0 %994
          %996 = vrot.lane.b32.xlu0 %v973, 1
          %v997 = vpop.permute.xlu0 %996
          %998 = vrot.lane.b32.xlu0 %v974, 1
          %v999 = vpop.permute.xlu0 %998
          %1000 = vrot.lane.b32.xlu0 %v975, 1
          %v1001 = vpop.permute.xlu0 %1000
          %1002 = vrot.lane.b32.xlu0 %v976, 1
          %v1003 = vpop.permute.xlu0 %1002
          %1004 = vrot.lane.b32.xlu0 %v977, 1
          %v1005 = vpop.permute.xlu0 %1004
          %1006 = vrot.lane.b32.xlu0 %v978, 1
          %v1007 = vpop.permute.xlu0 %1006
          %1008 = vrot.lane.b32.xlu0 %v979, 1
          %v1009 = vpop.permute.xlu0 %1008
          %1010 = vrot.lane.b32.xlu0 %v980, 1
          %v1011 = vpop.permute.xlu0 %1010
          %1012 = vrot.lane.b32.xlu0 %v981, 1
          %v1013 = vpop.permute.xlu0 %1012
          %1014 = vrot.lane.b32.xlu0 %v982, 1
          %v1015 = vpop.permute.xlu0 %1014
          %v1016 = vsel %vm983, 0.0, %v985
          %v1017 = vsel %vm983, 0.0, %v987
          %v1018 = vsel %vm983, 0.0, %v989
          %v1019 = vsel %vm983, 0.0, %v991
          %v1020 = vsel %vm983, 0.0, %v993
          %v1021 = vsel %vm983, 0.0, %v995
          %v1022 = vsel %vm983, 0.0, %v997
          %v1023 = vsel %vm983, 0.0, %v999
          %v1024 = vsel %vm983, 0.0, %v1001
          %v1025 = vsel %vm983, 0.0, %v1003
          %v1026 = vsel %vm983, 0.0, %v1005
          %v1027 = vsel %vm983, 0.0, %v1007
          %v1028 = vsel %vm983, 0.0, %v1009
          %v1029 = vsel %vm983, 0.0, %v1011
          %v1030 = vsel %vm983, 0.0, %v1013
          %v1031 = vsel %vm983, 0.0, %v1015
          %vm1032 = vcmp.eq.s32.totalorder %v804, 127
          %1033 = vrot.lane.b32.xlu0 %v967, 127
          %v1034 = vpop.permute.xlu0 %1033
          %1035 = vrot.lane.b32.xlu0 %v968, 127
          %v1036 = vpop.permute.xlu0 %1035
          %1037 = vrot.lane.b32.xlu0 %v969, 127
          %v1038 = vpop.permute.xlu0 %1037
          %1039 = vrot.lane.b32.xlu0 %v970, 127
          %v1040 = vpop.permute.xlu0 %1039
          %1041 = vrot.lane.b32.xlu0 %v971, 127
          %v1042 = vpop.permute.xlu0 %1041
          %1043 = vrot.lane.b32.xlu0 %v972, 127
          %v1044 = vpop.permute.xlu0 %1043
          %1045 = vrot.lane.b32.xlu0 %v973, 127
          %v1046 = vpop.permute.xlu0 %1045
          %1047 = vrot.lane.b32.xlu0 %v974, 127
          %v1048 = vpop.permute.xlu0 %1047
          %1049 = vrot.lane.b32.xlu0 %v975, 127
          %v1050 = vpop.permute.xlu0 %1049
          %1051 = vrot.lane.b32.xlu0 %v976, 127
          %v1052 = vpop.permute.xlu0 %1051
          %1053 = vrot.lane.b32.xlu0 %v977, 127
          %v1054 = vpop.permute.xlu0 %1053
          %1055 = vrot.lane.b32.xlu0 %v978, 127
          %v1056 = vpop.permute.xlu0 %1055
          %1057 = vrot.lane.b32.xlu0 %v979, 127
          %v1058 = vpop.permute.xlu0 %1057
          %1059 = vrot.lane.b32.xlu0 %v980, 127
          %v1060 = vpop.permute.xlu0 %1059
          %1061 = vrot.lane.b32.xlu0 %v981, 127
          %v1062 = vpop.permute.xlu0 %1061
          %1063 = vrot.lane.b32.xlu0 %v982, 127
          %v1064 = vpop.permute.xlu0 %1063
          %v1065 = vsel %vm1032, 0.0, %v1034
          %v1066 = vsel %vm1032, 0.0, %v1036
          %v1067 = vsel %vm1032, 0.0, %v1038
          %v1068 = vsel %vm1032, 0.0, %v1040
          %v1069 = vsel %vm1032, 0.0, %v1042
          %v1070 = vsel %vm1032, 0.0, %v1044
          %v1071 = vsel %vm1032, 0.0, %v1046
          %v1072 = vsel %vm1032, 0.0, %v1048
          %v1073 = vsel %vm1032, 0.0, %v1050
          %v1074 = vsel %vm1032, 0.0, %v1052
          %v1075 = vsel %vm1032, 0.0, %v1054
          %v1076 = vsel %vm1032, 0.0, %v1056
          %v1077 = vsel %vm1032, 0.0, %v1058
          %v1078 = vsel %vm1032, 0.0, %v1060
          %v1079 = vsel %vm1032, 0.0, %v1062
          %v1080 = vsel %vm1032, 0.0, %v1064
          %v1081 = vadd.f32 %v967, %v1016
          %v1082 = vadd.f32 %v968, %v1017
          %v1083 = vadd.f32 %v969, %v1018
          %v1084 = vadd.f32 %v970, %v1019
          %v1085 = vadd.f32 %v971, %v1020
          %v1086 = vadd.f32 %v972, %v1021
          %v1087 = vadd.f32 %v973, %v1022
          %v1088 = vadd.f32 %v974, %v1023
          %v1089 = vadd.f32 %v975, %v1024
          %v1090 = vadd.f32 %v976, %v1025
          %v1091 = vadd.f32 %v977, %v1026
          %v1092 = vadd.f32 %v978, %v1027
          %v1093 = vadd.f32 %v979, %v1028
          %v1094 = vadd.f32 %v980, %v1029
          %v1095 = vadd.f32 %v981, %v1030
          %v1096 = vadd.f32 %v982, %v1031
          %v1097 = vadd.f32 %v1081, %v1065
          %v1098 = vadd.f32 %v1082, %v1066
          %v1099 = vadd.f32 %v1083, %v1067
          %v1100 = vadd.f32 %v1084, %v1068
          %v1101 = vadd.f32 %v1085, %v1069
          %v1102 = vadd.f32 %v1086, %v1070
          %v1103 = vadd.f32 %v1087, %v1071
          %v1104 = vadd.f32 %v1088, %v1072
          %v1105 = vadd.f32 %v1089, %v1073
          %v1106 = vadd.f32 %v1090, %v1074
          %v1107 = vadd.f32 %v1091, %v1075
          %v1108 = vadd.f32 %v1092, %v1076
          %v1109 = vadd.f32 %v1093, %v1077
          %v1110 = vadd.f32 %v1094, %v1078
          %v1111 = vadd.f32 %v1095, %v1079
          %v1112 = vadd.f32 %v1096, %v1080
          %v1113 = vmul.f32 %v805, 9.0
          %v1114 = vmul.f32 %v806, 9.0
          %v1115 = vmul.f32 %v807, 9.0
          %v1116 = vmul.f32 %v808, 9.0
          %v1117 = vmul.f32 %v809, 9.0
          %v1118 = vmul.f32 %v810, 9.0
          %v1119 = vmul.f32 %v811, 9.0
          %v1120 = vmul.f32 %v812, 9.0
          %v1121 = vmul.f32 %v813, 9.0
          %v1122 = vmul.f32 %v814, 9.0
          %v1123 = vmul.f32 %v815, 9.0
          %v1124 = vmul.f32 %v816, 9.0
          %v1125 = vmul.f32 %v817, 9.0
          %v1126 = vmul.f32 %v818, 9.0
          %v1127 = vmul.f32 %v819, 9.0
          %v1128 = vmul.f32 %v820, 9.0
          %v1129 = vsub.f32 %v1113, %v1097
          %v1130 = vsub.f32 %v1114, %v1098
          %v1131 = vsub.f32 %v1115, %v1099
          %v1132 = vsub.f32 %v1116, %v1100
          %v1133 = vsub.f32 %v1117, %v1101
          %v1134 = vsub.f32 %v1118, %v1102
          %v1135 = vsub.f32 %v1119, %v1103
          %v1136 = vsub.f32 %v1120, %v1104
          %v1137 = vsub.f32 %v1121, %v1105
          %v1138 = vsub.f32 %v1122, %v1106
          %v1139 = vsub.f32 %v1123, %v1107
          %v1140 = vsub.f32 %v1124, %v1108
          %v1141 = vsub.f32 %v1125, %v1109
          %v1142 = vsub.f32 %v1126, %v1110
          %v1143 = vsub.f32 %v1127, %v1111
          %v1144 = vsub.f32 %v1128, %v1112
          %v1145 = vmax.f32 %v1129, 0.0
          %v1146 = vmax.f32 %v1130, 0.0
          %v1147 = vmax.f32 %v1131, 0.0
          %v1148 = vmax.f32 %v1132, 0.0
          %v1149 = vmax.f32 %v1133, 0.0
          %v1150 = vmax.f32 %v1134, 0.0
          %v1151 = vmax.f32 %v1135, 0.0
          %v1152 = vmax.f32 %v1136, 0.0
          %v1153 = vmax.f32 %v1137, 0.0
          %v1154 = vmax.f32 %v1138, 0.0
          %v1155 = vmax.f32 %v1139, 0.0
          %v1156 = vmax.f32 %v1140, 0.0
          %v1157 = vmax.f32 %v1141, 0.0
          %v1158 = vmax.f32 %v1142, 0.0
          %v1159 = vmax.f32 %v1143, 0.0
          %v1160 = vmax.f32 %v1144, 0.0
          %vm1161 = vcmp.gt.f32.partialorder %v1145, 0.1
          %vm1162 = vcmp.gt.f32.partialorder %v1146, 0.1
          %vm1163 = vcmp.gt.f32.partialorder %v1147, 0.1
          %vm1164 = vcmp.gt.f32.partialorder %v1148, 0.1
          %vm1165 = vcmp.gt.f32.partialorder %v1149, 0.1
          %vm1166 = vcmp.gt.f32.partialorder %v1150, 0.1
          %vm1167 = vcmp.gt.f32.partialorder %v1151, 0.1
          %vm1168 = vcmp.gt.f32.partialorder %v1152, 0.1
          %vm1169 = vcmp.gt.f32.partialorder %v1153, 0.1
          %vm1170 = vcmp.gt.f32.partialorder %v1154, 0.1
          %vm1171 = vcmp.gt.f32.partialorder %v1155, 0.1
          %vm1172 = vcmp.gt.f32.partialorder %v1156, 0.1
          %vm1173 = vcmp.gt.f32.partialorder %v1157, 0.1
          %vm1174 = vcmp.gt.f32.partialorder %v1158, 0.1
          %vm1175 = vcmp.gt.f32.partialorder %v1159, 0.1
          %vm1176 = vcmp.gt.f32.partialorder %v1160, 0.1
          %v1177 = vsel %vm1161, 1.0, 0.0
          %v1178 = vsel %vm1162, 1.0, 0.0
          %v1179 = vsel %vm1163, 1.0, 0.0
          %v1180 = vsel %vm1164, 1.0, 0.0
          %v1181 = vsel %vm1165, 1.0, 0.0
          %v1182 = vsel %vm1166, 1.0, 0.0
          %v1183 = vsel %vm1167, 1.0, 0.0
          %v1184 = vsel %vm1168, 1.0, 0.0
          %v1185 = vsel %vm1169, 1.0, 0.0
          %v1186 = vsel %vm1170, 1.0, 0.0
          %v1187 = vsel %vm1171, 1.0, 0.0
          %v1188 = vsel %vm1172, 1.0, 0.0
          %v1189 = vsel %vm1173, 1.0, 0.0
          %v1190 = vsel %vm1174, 1.0, 0.0
          %v1191 = vsel %vm1175, 1.0, 0.0
          %v1192 = vsel %vm1176, 1.0, 0.0
          %v1193 = vld [vmem:[#allocation3] sm:$0xff]
          %v1194 = vld [vmem:[#allocation3 + $0x8] sm:$0xff]
          %v1195 = vld [vmem:[#allocation3 + $0x10] sm:$0xff]
          %v1196 = vld [vmem:[#allocation3 + $0x18] sm:$0xff]
          %v1197 = vld [vmem:[#allocation3 + $0x20] sm:$0xff]
          %v1198 = vld [vmem:[#allocation3 + $0x28] sm:$0xff]
          %v1199 = vld [vmem:[#allocation3 + $0x30] sm:$0xff]
          %v1200 = vld [vmem:[#allocation3 + $0x38] sm:$0xff]
          %v1201 = vld [vmem:[#allocation3 + $0x40] sm:$0xff]
          %v1202 = vld [vmem:[#allocation3 + $0x48] sm:$0xff]
          %v1203 = vld [vmem:[#allocation3 + $0x50] sm:$0xff]
          %v1204 = vld [vmem:[#allocation3 + $0x58] sm:$0xff]
          %v1205 = vld [vmem:[#allocation3 + $0x60] sm:$0xff]
          %v1206 = vld [vmem:[#allocation3 + $0x68] sm:$0xff]
          %v1207 = vld [vmem:[#allocation3 + $0x70] sm:$0xff]
          %v1208 = vld [vmem:[#allocation3 + $0x78] sm:$0xff]
          %v1209 = vrot.slane %v1193, 7
          %v1210 = vrot.slane %v1194, 7
          %v1211 = vrot.slane %v1195, 7
          %v1212 = vrot.slane %v1196, 7
          %v1213 = vrot.slane %v1197, 7
          %v1214 = vrot.slane %v1198, 7
          %v1215 = vrot.slane %v1199, 7
          %v1216 = vrot.slane %v1200, 7
          %v1217 = vrot.slane %v1201, 7
          %v1218 = vrot.slane %v1202, 7
          %v1219 = vrot.slane %v1203, 7
          %v1220 = vrot.slane %v1204, 7
          %v1221 = vrot.slane %v1205, 7
          %v1222 = vrot.slane %v1206, 7
          %v1223 = vrot.slane %v1207, 7
          %v1224 = vrot.slane %v1208, 7
          %v1225 = vsel %vm853, %v1223, %v1224
          %v1226 = vsel %vm853, %v1222, %v1223
          %v1227 = vsel %vm853, %v1221, %v1222
          %v1228 = vsel %vm853, %v1220, %v1221
          %v1229 = vsel %vm853, %v1219, %v1220
          %v1230 = vsel %vm853, %v1218, %v1219
          %v1231 = vsel %vm853, %v1217, %v1218
          %v1232 = vsel %vm853, %v1216, %v1217
          %v1233 = vsel %vm853, %v1215, %v1216
          %v1234 = vsel %vm853, %v1214, %v1215
          %v1235 = vsel %vm853, %v1213, %v1214
          %v1236 = vsel %vm853, %v1212, %v1213
          %v1237 = vsel %vm853, %v1211, %v1212
          %v1238 = vsel %vm853, %v1210, %v1211
          %v1239 = vsel %vm853, %v1209, %v1210
          %v1240 = vsel %vm853, %v1224, %v1209
          %v1241 = vsel %vm821, 0.0, %v1240
          %v1242 = vsel %vm822, 0.0, %v1239
          %v1243 = vsel %vm823, 0.0, %v1238
          %v1244 = vsel %vm824, 0.0, %v1237
          %v1245 = vsel %vm825, 0.0, %v1236
          %v1246 = vsel %vm826, 0.0, %v1235
          %v1247 = vsel %vm827, 0.0, %v1234
          %v1248 = vsel %vm828, 0.0, %v1233
          %v1249 = vsel %vm829, 0.0, %v1232
          %v1250 = vsel %vm830, 0.0, %v1231
          %v1251 = vsel %vm831, 0.0, %v1230
          %v1252 = vsel %vm832, 0.0, %v1229
          %v1253 = vsel %vm833, 0.0, %v1228
          %v1254 = vsel %vm834, 0.0, %v1227
          %v1255 = vsel %vm835, 0.0, %v1226
          %v1256 = vsel %vm836, 0.0, %v1225
          %v1257 = vrot.slane %v1193, 1
          %v1258 = vrot.slane %v1194, 1
          %v1259 = vrot.slane %v1195, 1
          %v1260 = vrot.slane %v1196, 1
          %v1261 = vrot.slane %v1197, 1
          %v1262 = vrot.slane %v1198, 1
          %v1263 = vrot.slane %v1199, 1
          %v1264 = vrot.slane %v1200, 1
          %v1265 = vrot.slane %v1201, 1
          %v1266 = vrot.slane %v1202, 1
          %v1267 = vrot.slane %v1203, 1
          %v1268 = vrot.slane %v1204, 1
          %v1269 = vrot.slane %v1205, 1
          %v1270 = vrot.slane %v1206, 1
          %v1271 = vrot.slane %v1207, 1
          %v1272 = vrot.slane %v1208, 1
          %v1273 = vsel %vm918, %v1271, %v1272
          %v1274 = vsel %vm918, %v1270, %v1271
          %v1275 = vsel %vm918, %v1269, %v1270
          %v1276 = vsel %vm918, %v1268, %v1269
          %v1277 = vsel %vm918, %v1267, %v1268
          %v1278 = vsel %vm918, %v1266, %v1267
          %v1279 = vsel %vm918, %v1265, %v1266
          %v1280 = vsel %vm918, %v1264, %v1265
          %v1281 = vsel %vm918, %v1263, %v1264
          %v1282 = vsel %vm918, %v1262, %v1263
          %v1283 = vsel %vm918, %v1261, %v1262
          %v1284 = vsel %vm918, %v1260, %v1261
          %v1285 = vsel %vm918, %v1259, %v1260
          %v1286 = vsel %vm918, %v1258, %v1259
          %v1287 = vsel %vm918, %v1257, %v1258
          %v1288 = vsel %vm918, %v1272, %v1257
          %v1289 = vsel %vm886, 0.0, %v1287
          %v1290 = vsel %vm887, 0.0, %v1286
          %v1291 = vsel %vm888, 0.0, %v1285
          %v1292 = vsel %vm889, 0.0, %v1284
          %v1293 = vsel %vm890, 0.0, %v1283
          %v1294 = vsel %vm891, 0.0, %v1282
          %v1295 = vsel %vm892, 0.0, %v1281
          %v1296 = vsel %vm893, 0.0, %v1280
          %v1297 = vsel %vm894, 0.0, %v1279
          %v1298 = vsel %vm895, 0.0, %v1278
          %v1299 = vsel %vm896, 0.0, %v1277
          %v1300 = vsel %vm897, 0.0, %v1276
          %v1301 = vsel %vm898, 0.0, %v1275
          %v1302 = vsel %vm899, 0.0, %v1274
          %v1303 = vsel %vm900, 0.0, %v1273
          %v1304 = vsel %vm901, 0.0, %v1288
          %v1305 = vadd.f32 %v1193, %v1241
          %v1306 = vadd.f32 %v1194, %v1242
          %v1307 = vadd.f32 %v1195, %v1243
          %v1308 = vadd.f32 %v1196, %v1244
          %v1309 = vadd.f32 %v1197, %v1245
          %v1310 = vadd.f32 %v1198, %v1246
          %v1311 = vadd.f32 %v1199, %v1247
          %v1312 = vadd.f32 %v1200, %v1248
          %v1313 = vadd.f32 %v1201, %v1249
          %v1314 = vadd.f32 %v1202, %v1250
          %v1315 = vadd.f32 %v1203, %v1251
          %v1316 = vadd.f32 %v1204, %v1252
          %v1317 = vadd.f32 %v1205, %v1253
          %v1318 = vadd.f32 %v1206, %v1254
          %v1319 = vadd.f32 %v1207, %v1255
          %v1320 = vadd.f32 %v1208, %v1256
          %v1321 = vadd.f32 %v1305, %v1289
          %v1322 = vadd.f32 %v1306, %v1290
          %v1323 = vadd.f32 %v1307, %v1291
          %v1324 = vadd.f32 %v1308, %v1292
          %v1325 = vadd.f32 %v1309, %v1293
          %v1326 = vadd.f32 %v1310, %v1294
          %v1327 = vadd.f32 %v1311, %v1295
          %v1328 = vadd.f32 %v1312, %v1296
          %v1329 = vadd.f32 %v1313, %v1297
          %v1330 = vadd.f32 %v1314, %v1298
          %v1331 = vadd.f32 %v1315, %v1299
          %v1332 = vadd.f32 %v1316, %v1300
          %v1333 = vadd.f32 %v1317, %v1301
          %v1334 = vadd.f32 %v1318, %v1302
          %v1335 = vadd.f32 %v1319, %v1303
          %v1336 = vadd.f32 %v1320, %v1304
          %1337 = vrot.lane.b32.xlu0 %v1321, 1
          %v1338 = vpop.permute.xlu0 %1337
          %1339 = vrot.lane.b32.xlu0 %v1322, 1
          %v1340 = vpop.permute.xlu0 %1339
          %1341 = vrot.lane.b32.xlu0 %v1323, 1
          %v1342 = vpop.permute.xlu0 %1341
          %1343 = vrot.lane.b32.xlu0 %v1324, 1
          %v1344 = vpop.permute.xlu0 %1343
          %1345 = vrot.lane.b32.xlu0 %v1325, 1
          %v1346 = vpop.permute.xlu0 %1345
          %1347 = vrot.lane.b32.xlu0 %v1326, 1
          %v1348 = vpop.permute.xlu0 %1347
          %1349 = vrot.lane.b32.xlu0 %v1327, 1
          %v1350 = vpop.permute.xlu0 %1349
          %1351 = vrot.lane.b32.xlu0 %v1328, 1
          %v1352 = vpop.permute.xlu0 %1351
          %1353 = vrot.lane.b32.xlu0 %v1329, 1
          %v1354 = vpop.permute.xlu0 %1353
          %1355 = vrot.lane.b32.xlu0 %v1330, 1
          %v1356 = vpop.permute.xlu0 %1355
          %1357 = vrot.lane.b32.xlu0 %v1331, 1
          %v1358 = vpop.permute.xlu0 %1357
          %1359 = vrot.lane.b32.xlu0 %v1332, 1
          %v1360 = vpop.permute.xlu0 %1359
          %1361 = vrot.lane.b32.xlu0 %v1333, 1
          %v1362 = vpop.permute.xlu0 %1361
          %1363 = vrot.lane.b32.xlu0 %v1334, 1
          %v1364 = vpop.permute.xlu0 %1363
          %1365 = vrot.lane.b32.xlu0 %v1335, 1
          %v1366 = vpop.permute.xlu0 %1365
          %1367 = vrot.lane.b32.xlu0 %v1336, 1
          %v1368 = vpop.permute.xlu0 %1367
          %v1369 = vsel %vm983, 0.0, %v1338
          %v1370 = vsel %vm983, 0.0, %v1340
          %v1371 = vsel %vm983, 0.0, %v1342
          %v1372 = vsel %vm983, 0.0, %v1344
          %v1373 = vsel %vm983, 0.0, %v1346
          %v1374 = vsel %vm983, 0.0, %v1348
          %v1375 = vsel %vm983, 0.0, %v1350
          %v1376 = vsel %vm983, 0.0, %v1352
          %v1377 = vsel %vm983, 0.0, %v1354
          %v1378 = vsel %vm983, 0.0, %v1356
          %v1379 = vsel %vm983, 0.0, %v1358
          %v1380 = vsel %vm983, 0.0, %v1360
          %v1381 = vsel %vm983, 0.0, %v1362
          %v1382 = vsel %vm983, 0.0, %v1364
          %v1383 = vsel %vm983, 0.0, %v1366
          %v1384 = vsel %vm983, 0.0, %v1368
          %1385 = vrot.lane.b32.xlu0 %v1321, 127
          %v1386 = vpop.permute.xlu0 %1385
          %1387 = vrot.lane.b32.xlu0 %v1322, 127
          %v1388 = vpop.permute.xlu0 %1387
          %1389 = vrot.lane.b32.xlu0 %v1323, 127
          %v1390 = vpop.permute.xlu0 %1389
          %1391 = vrot.lane.b32.xlu0 %v1324, 127
          %v1392 = vpop.permute.xlu0 %1391
          %1393 = vrot.lane.b32.xlu0 %v1325, 127
          %v1394 = vpop.permute.xlu0 %1393
          %1395 = vrot.lane.b32.xlu0 %v1326, 127
          %v1396 = vpop.permute.xlu0 %1395
          %1397 = vrot.lane.b32.xlu0 %v1327, 127
          %v1398 = vpop.permute.xlu0 %1397
          %1399 = vrot.lane.b32.xlu0 %v1328, 127
          %v1400 = vpop.permute.xlu0 %1399
          %1401 = vrot.lane.b32.xlu0 %v1329, 127
          %v1402 = vpop.permute.xlu0 %1401
          %1403 = vrot.lane.b32.xlu0 %v1330, 127
          %v1404 = vpop.permute.xlu0 %1403
          %1405 = vrot.lane.b32.xlu0 %v1331, 127
          %v1406 = vpop.permute.xlu0 %1405
          %1407 = vrot.lane.b32.xlu0 %v1332, 127
          %v1408 = vpop.permute.xlu0 %1407
          %1409 = vrot.lane.b32.xlu0 %v1333, 127
          %v1410 = vpop.permute.xlu0 %1409
          %1411 = vrot.lane.b32.xlu0 %v1334, 127
          %v1412 = vpop.permute.xlu0 %1411
          %1413 = vrot.lane.b32.xlu0 %v1335, 127
          %v1414 = vpop.permute.xlu0 %1413
          %1415 = vrot.lane.b32.xlu0 %v1336, 127
          %v1416 = vpop.permute.xlu0 %1415
          %v1417 = vsel %vm1032, 0.0, %v1386
          %v1418 = vsel %vm1032, 0.0, %v1388
          %v1419 = vsel %vm1032, 0.0, %v1390
          %v1420 = vsel %vm1032, 0.0, %v1392
          %v1421 = vsel %vm1032, 0.0, %v1394
          %v1422 = vsel %vm1032, 0.0, %v1396
          %v1423 = vsel %vm1032, 0.0, %v1398
          %v1424 = vsel %vm1032, 0.0, %v1400
          %v1425 = vsel %vm1032, 0.0, %v1402
          %v1426 = vsel %vm1032, 0.0, %v1404
          %v1427 = vsel %vm1032, 0.0, %v1406
          %v1428 = vsel %vm1032, 0.0, %v1408
          %v1429 = vsel %vm1032, 0.0, %v1410
          %v1430 = vsel %vm1032, 0.0, %v1412
          %v1431 = vsel %vm1032, 0.0, %v1414
          %v1432 = vsel %vm1032, 0.0, %v1416
          %v1433 = vadd.f32 %v1321, %v1369
          %v1434 = vadd.f32 %v1322, %v1370
          %v1435 = vadd.f32 %v1323, %v1371
          %v1436 = vadd.f32 %v1324, %v1372
          %v1437 = vadd.f32 %v1325, %v1373
          %v1438 = vadd.f32 %v1326, %v1374
          %v1439 = vadd.f32 %v1327, %v1375
          %v1440 = vadd.f32 %v1328, %v1376
          %v1441 = vadd.f32 %v1329, %v1377
          %v1442 = vadd.f32 %v1330, %v1378
          %v1443 = vadd.f32 %v1331, %v1379
          %v1444 = vadd.f32 %v1332, %v1380
          %v1445 = vadd.f32 %v1333, %v1381
          %v1446 = vadd.f32 %v1334, %v1382
          %v1447 = vadd.f32 %v1335, %v1383
          %v1448 = vadd.f32 %v1336, %v1384
          %v1449 = vadd.f32 %v1433, %v1417
          %v1450 = vadd.f32 %v1434, %v1418
          %v1451 = vadd.f32 %v1435, %v1419
          %v1452 = vadd.f32 %v1436, %v1420
          %v1453 = vadd.f32 %v1437, %v1421
          %v1454 = vadd.f32 %v1438, %v1422
          %v1455 = vadd.f32 %v1439, %v1423
          %v1456 = vadd.f32 %v1440, %v1424
          %v1457 = vadd.f32 %v1441, %v1425
          %v1458 = vadd.f32 %v1442, %v1426
          %v1459 = vadd.f32 %v1443, %v1427
          %v1460 = vadd.f32 %v1444, %v1428
          %v1461 = vadd.f32 %v1445, %v1429
          %v1462 = vadd.f32 %v1446, %v1430
          %v1463 = vadd.f32 %v1447, %v1431
          %v1464 = vadd.f32 %v1448, %v1432
          %v1465 = vmul.f32 %v1193, 9.0
          %v1466 = vmul.f32 %v1194, 9.0
          %v1467 = vmul.f32 %v1195, 9.0
          %v1468 = vmul.f32 %v1196, 9.0
          %v1469 = vmul.f32 %v1197, 9.0
          %v1470 = vmul.f32 %v1198, 9.0
          %v1471 = vmul.f32 %v1199, 9.0
          %v1472 = vmul.f32 %v1200, 9.0
          %v1473 = vmul.f32 %v1201, 9.0
          %v1474 = vmul.f32 %v1202, 9.0
          %v1475 = vmul.f32 %v1203, 9.0
          %v1476 = vmul.f32 %v1204, 9.0
          %v1477 = vmul.f32 %v1205, 9.0
          %v1478 = vmul.f32 %v1206, 9.0
          %v1479 = vmul.f32 %v1207, 9.0
          %v1480 = vmul.f32 %v1208, 9.0
          %v1481 = vsub.f32 %v1465, %v1449
          %v1482 = vsub.f32 %v1466, %v1450
          %v1483 = vsub.f32 %v1467, %v1451
          %v1484 = vsub.f32 %v1468, %v1452
          %v1485 = vsub.f32 %v1469, %v1453
          %v1486 = vsub.f32 %v1470, %v1454
          %v1487 = vsub.f32 %v1471, %v1455
          %v1488 = vsub.f32 %v1472, %v1456
          %v1489 = vsub.f32 %v1473, %v1457
          %v1490 = vsub.f32 %v1474, %v1458
          %v1491 = vsub.f32 %v1475, %v1459
          %v1492 = vsub.f32 %v1476, %v1460
          %v1493 = vsub.f32 %v1477, %v1461
          %v1494 = vsub.f32 %v1478, %v1462
          %v1495 = vsub.f32 %v1479, %v1463
          %v1496 = vsub.f32 %v1480, %v1464
          %v1497 = vmax.f32 %v1481, 0.0
          %v1498 = vmax.f32 %v1482, 0.0
          %v1499 = vmax.f32 %v1483, 0.0
          %v1500 = vmax.f32 %v1484, 0.0
          %v1501 = vmax.f32 %v1485, 0.0
          %v1502 = vmax.f32 %v1486, 0.0
          %v1503 = vmax.f32 %v1487, 0.0
          %v1504 = vmax.f32 %v1488, 0.0
          %v1505 = vmax.f32 %v1489, 0.0
          %v1506 = vmax.f32 %v1490, 0.0
          %v1507 = vmax.f32 %v1491, 0.0
          %v1508 = vmax.f32 %v1492, 0.0
          %v1509 = vmax.f32 %v1493, 0.0
          %v1510 = vmax.f32 %v1494, 0.0
          %v1511 = vmax.f32 %v1495, 0.0
          %v1512 = vmax.f32 %v1496, 0.0
          %vm1513 = vcmp.gt.f32.partialorder %v1497, 0.1
          %vm1514 = vcmp.gt.f32.partialorder %v1498, 0.1
          %vm1515 = vcmp.gt.f32.partialorder %v1499, 0.1
          %vm1516 = vcmp.gt.f32.partialorder %v1500, 0.1
          %vm1517 = vcmp.gt.f32.partialorder %v1501, 0.1
          %vm1518 = vcmp.gt.f32.partialorder %v1502, 0.1
          %vm1519 = vcmp.gt.f32.partialorder %v1503, 0.1
          %vm1520 = vcmp.gt.f32.partialorder %v1504, 0.1
          %vm1521 = vcmp.gt.f32.partialorder %v1505, 0.1
          %vm1522 = vcmp.gt.f32.partialorder %v1506, 0.1
          %vm1523 = vcmp.gt.f32.partialorder %v1507, 0.1
          %vm1524 = vcmp.gt.f32.partialorder %v1508, 0.1
          %vm1525 = vcmp.gt.f32.partialorder %v1509, 0.1
          %vm1526 = vcmp.gt.f32.partialorder %v1510, 0.1
          %vm1527 = vcmp.gt.f32.partialorder %v1511, 0.1
          %vm1528 = vcmp.gt.f32.partialorder %v1512, 0.1
          %v1529 = vsel %vm1513, 1.0, 0.0
          %v1530 = vsel %vm1514, 1.0, 0.0
          %v1531 = vsel %vm1515, 1.0, 0.0
          %v1532 = vsel %vm1516, 1.0, 0.0
          %v1533 = vsel %vm1517, 1.0, 0.0
          %v1534 = vsel %vm1518, 1.0, 0.0
          %v1535 = vsel %vm1519, 1.0, 0.0
          %v1536 = vsel %vm1520, 1.0, 0.0
          %v1537 = vsel %vm1521, 1.0, 0.0
          %v1538 = vsel %vm1522, 1.0, 0.0
          %v1539 = vsel %vm1523, 1.0, 0.0
          %v1540 = vsel %vm1524, 1.0, 0.0
          %v1541 = vsel %vm1525, 1.0, 0.0
          %v1542 = vsel %vm1526, 1.0, 0.0
          %v1543 = vsel %vm1527, 1.0, 0.0
          %v1544 = vsel %vm1528, 1.0, 0.0
          %v1545 = vadd.f32 %v1529, %v1530
          %v1546 = vadd.f32 %v1545, %v1531
          %v1547 = vadd.f32 %v1546, %v1532
          %v1548 = vadd.f32 %v1547, %v1533
          %v1549 = vadd.f32 %v1548, %v1534
          %v1550 = vadd.f32 %v1549, %v1535
          %v1551 = vadd.f32 %v1550, %v1536
          %v1552 = vadd.f32 %v1551, %v1537
          %v1553 = vadd.f32 %v1552, %v1538
          %v1554 = vadd.f32 %v1553, %v1539
          %v1555 = vadd.f32 %v1554, %v1540
          %v1556 = vadd.f32 %v1555, %v1541
          %v1557 = vadd.f32 %v1556, %v1542
          %v1558 = vadd.f32 %v1557, %v1543
          %v1559 = vadd.f32 %v1558, %v1544
          %v1560 = vrot.slane %v1559, 4
          %v1561 = vadd.f32 %v1559, %v1560
          %v1562 = vrot.slane %v1561, 2
          %v1563 = vadd.f32 %v1561, %v1562
          %v1564 = vrot.slane %v1563, 1
          %v1565 = vadd.f32 %v1563, %v1564
          %1566 = vst [vmem:[%s219] sm:$0x1] %v1565
          %v1567 = vadd.f32 %v1177, %v1178
          %v1568 = vadd.f32 %v1567, %v1179
          %v1569 = vadd.f32 %v1568, %v1180
          %v1570 = vadd.f32 %v1569, %v1181
          %v1571 = vadd.f32 %v1570, %v1182
          %v1572 = vadd.f32 %v1571, %v1183
          %v1573 = vadd.f32 %v1572, %v1184
          %v1574 = vadd.f32 %v1573, %v1185
          %v1575 = vadd.f32 %v1574, %v1186
          %v1576 = vadd.f32 %v1575, %v1187
          %v1577 = vadd.f32 %v1576, %v1188
          %v1578 = vadd.f32 %v1577, %v1189
          %v1579 = vadd.f32 %v1578, %v1190
          %v1580 = vadd.f32 %v1579, %v1191
          %v1581 = vadd.f32 %v1580, %v1192
          %v1582 = vrot.slane %v1581, 4
          %v1583 = vadd.f32 %v1581, %v1582
          %v1584 = vrot.slane %v1583, 2
          %v1585 = vadd.f32 %v1583, %v1584
          %v1586 = vrot.slane %v1585, 1
          %v1587 = vadd.f32 %v1585, %v1586
          %1588 = vst [vmem:[%s219 + $0x1] sm:$0x1] %v1587
          %v1589 = vmul.f32 %v1529, %v1177
          %v1590 = vmul.f32 %v1530, %v1178
          %v1591 = vmul.f32 %v1531, %v1179
          %v1592 = vmul.f32 %v1532, %v1180
          %v1593 = vmul.f32 %v1533, %v1181
          %v1594 = vmul.f32 %v1534, %v1182
          %v1595 = vmul.f32 %v1535, %v1183
          %v1596 = vmul.f32 %v1536, %v1184
          %v1597 = vmul.f32 %v1537, %v1185
          %v1598 = vmul.f32 %v1538, %v1186
          %v1599 = vmul.f32 %v1539, %v1187
          %v1600 = vmul.f32 %v1540, %v1188
          %v1601 = vmul.f32 %v1541, %v1189
          %v1602 = vmul.f32 %v1542, %v1190
          %v1603 = vmul.f32 %v1543, %v1191
          %v1604 = vmul.f32 %v1544, %v1192
          %v1605 = vadd.f32 %v1589, %v1590
          %v1606 = vadd.f32 %v1605, %v1591
          %v1607 = vadd.f32 %v1606, %v1592
          %v1608 = vadd.f32 %v1607, %v1593
          %v1609 = vadd.f32 %v1608, %v1594
          %v1610 = vadd.f32 %v1609, %v1595
          %v1611 = vadd.f32 %v1610, %v1596
          %v1612 = vadd.f32 %v1611, %v1597
          %v1613 = vadd.f32 %v1612, %v1598
          %v1614 = vadd.f32 %v1613, %v1599
          %v1615 = vadd.f32 %v1614, %v1600
          %v1616 = vadd.f32 %v1615, %v1601
          %v1617 = vadd.f32 %v1616, %v1602
          %v1618 = vadd.f32 %v1617, %v1603
          %v1619 = vadd.f32 %v1618, %v1604
          %v1620 = vrot.slane %v1619, 4
          %v1621 = vadd.f32 %v1619, %v1620
          %v1622 = vrot.slane %v1621, 2
          %v1623 = vadd.f32 %v1621, %v1622
          %v1624 = vrot.slane %v1623, 1
          %v1625 = vadd.f32 %v1623, %v1624
          %1626 = vst [vmem:[%s219 + $0x2] sm:$0x1] %v1625
        $region44: #{tpu_custom_call.1} parent=27 // pred_fallthru
          _
        %p1627 = scmp.lt.s32.totalorder %s23, 1
        %s1628 = scalar_select %p1627, %s23, 1
        %s1629 = smul.addr %s1628, 4
        %s1630 = scalar_lea.vmem %s2, %s1629
        // Predicated region
        $region45: #{tpu_custom_call.1} parent=27 // pred_check
          %p1631 = pneg %p103
        $region46: #{tpu_custom_call.1} parent=27 // pred_check_branch
          %1633 = sbr.rel (%p1631) target = $region48
        $region47: #{tpu_custom_call.1} parent=27 // pred_region
          _
        $region48: #{tpu_custom_call.1} parent=27 // pred_fallthru
          _
      $region28: #{tpu_custom_call.1} parent=5 // pred_fallthru
        _
      %p1634 = scmp.le.s32.totalorder 2, %s14
      // Predicated region
      $region49: #{tpu_custom_call.1} parent=5 // pred_check
        %p1635 = pneg %p1634
      $region50: #{tpu_custom_call.1} parent=5 // pred_check_branch
        %1637 = sbr.rel (%p1635) target = $region52
      $region51: #{tpu_custom_call.1} parent=5 // pred_region
        %s1638 = ssub.s32 %s14, 2
        // Predicated region
        $region53: #{tpu_custom_call.1} parent=51 // pred_check
          %p1639 = pneg %p109
        $region54: #{tpu_custom_call.1} parent=51 // pred_check_branch
          %1641 = sbr.rel (%p1639) target = $region56
        $region55: #{tpu_custom_call.1} parent=51 // pred_region
          %p1642 = scmp.lt.s32.totalorder %s25, 1
          %s1643 = scalar_select %p1642, %s25, 1
          %s1644 = smul.addr %s1643, 4
          %s1645 = scalar_lea.vmem %s2, %s1644
        $region56: #{tpu_custom_call.1} parent=51 // pred_fallthru
          _
      $region52: #{tpu_custom_call.1} parent=5 // pred_fallthru
        _
    $region6: #{tpu_custom_call.1} parent=1 // loop_footer
      %s18 = sadd.s32 1, %s14
    $region7: #{tpu_custom_call.1} parent=1 // loop_footer_branch
      %13 = sbr.rel target = $region3
    $region8: #{tpu_custom_call.1} parent=1 // loop_exit
      _
    %1646 = vsyncpa [#allocation5], 1
    %s1647 = scalar_lea.sflag [#allocation5], 1
    %1648 = vsyncpa %s1647, 1
    %1649 = vsyncpa [#allocation7], 1
    %s1650 = scalar_lea.sflag [#allocation7], 1
    %1651 = vsyncpa %s1650, 1

</llo_original>
